<compile_context>
chip_gen: v5e
topology: v5e:2x2
jax: 0.10.0
libtpu: 0.0.40
codegen_flags: <defaults>
</compile_context>

<pallas_src>
import numpy as np

import jax
import jax.numpy as jnp
from jax.experimental import pallas as pl
from jax.experimental.pallas import tpu as pltpu

_BN_EPS = 1e-5
_W_DTYPE = jnp.bfloat16     # matmul-operand dtype (accumulation stays f32)


# ----------------------------- helpers (host) -------------------------------

def bn_fold(bn):
    """Fold eval-mode BatchNorm into per-feature scale/shift."""
    scale = bn["gamma"] * jax.lax.rsqrt(bn["var"] + _BN_EPS)
    shift = bn["beta"] - bn["mean"] * scale
    return scale, shift


def _build_plan(layers=(1, 1, 1), l0=8, inplanes=64):
    """Static per-residual-block description (channels, stride, lengths)."""
    plan = []
    L = l0
    for planes, nblocks, stride in ((64, layers[0], 1),
                                    (128, layers[1], 2),
                                    (256, layers[2], 2)):
        for i in range(nblocks):
            s = stride if i == 0 else 1
            l_out = (L + 2 - 3) // s + 1
            plan.append(dict(cin=inplanes, cout=planes, stride=s,
                             l_in=L, l_out=l_out,
                             down=(i == 0 and stride > 1)))
            inplanes, L = planes, l_out
    return plan


def _fold_conv3(w, bn):
    """Conv1d(k=3, bias=False)+BN -> (3*Cin, Cout) weight, (Cout,) shift."""
    scale, shift = bn_fold(bn)
    wt = jnp.transpose(w, (2, 1, 0)) * scale[None, None, :]      # (3, Cin, Cout)
    k, cin, cout = wt.shape
    return wt.reshape(k * cin, cout), shift


def _fold_conv1(w, bn):
    """Conv1d(k=1, bias=False)+BN -> (Cin, Cout) weight, (Cout,) shift."""
    scale, shift = bn_fold(bn)
    return jnp.transpose(w[:, :, 0]) * scale[None, :], shift


def prepare_inputs(params, plan, inplanes=64):
    """One-time host prep: fold BN, transpose weights, bake layout permutations,
    cast weights to bf16 and coalesce them into a few row-packed arrays."""
    weights = []    # (name, 2-D array)   -> bf16 packs, grouped by ncols
    biases = []     # (name, 1-D vector)  -> one f32 table

    # bn_d0 -> dense1 -> bn_d1 folded into a single affine matmul.
    s0, t0 = bn_fold(params["bn_d0"])
    s1, t1 = bn_fold(params["bn_d1"])
    w1t = params["dense1"]["w"].T                                  # (F, h1)
    a1 = (s0[:, None] * w1t) * s1[None, :]
    c1 = t0 @ (w1t * s1[None, :]) + params["dense1"]["b"] * s1 + t1

    c0 = inplanes
    l0 = int(w1t.shape[1]) // c0
    # Column permutation so dense1 output columns are ordered (l, c)
    # (PyTorch reshape(B, 64, reshaped_dim) is channel-major: old col = c*l0+l).
    perm = np.arange(c0 * l0).reshape(c0, l0).T.reshape(-1)
    weights.append(("a1", a1[:, perm]))
    biases.append(("c1", c1[perm]))

    blocks = (list(params["layer1"]) + list(params["layer2"])
              + list(params["layer3"]))
    for i, (blk, p) in enumerate(zip(plan, blocks)):
        w, b = _fold_conv3(p["conv1_w"], p["bn1"])
        weights.append((f"w1_{i}", w)); biases.append((f"b1_{i}", b))
        w, b = _fold_conv3(p["conv2_w"], p["bn2"])
        weights.append((f"w2_{i}", w)); biases.append((f"b2_{i}", b))
        if blk["down"]:
            w, b = _fold_conv1(p["down_w"], p["down_bn"])
            weights.append((f"wd_{i}", w)); biases.append((f"bd_{i}", b))

    # dense2 + bn_d2, with the Flatten (channel-major) permutation baked in.
    s2, t2 = bn_fold(params["bn_d2"])
    w2t = params["dense2"]["w"].T                                  # (h1/2, h2)
    a2 = w2t * s2[None, :]
    c2 = params["dense2"]["b"] * s2 + t2
    cf = plan[-1]["cout"]
    lp = plan[-1]["l_out"] // 2                                    # AvgPool1d(2) length
    perm2 = np.arange(cf * lp).reshape(cf, lp).T.reshape(-1)       # new row p*cf + c
    weights.append(("a2", a2[perm2, :])); biases.append(("c2", c2))

    # dense3 (plain linear).
    weights.append(("a3", params["dense3"]["w"].T))
    biases.append(("c3", params["dense3"]["b"]))

    # ---- coalesce weights: one bf16 pack per output width (fewer, larger DMAs)
    ALIGN = 16                                    # bf16 sublane tile alignment
    groups = {}
    for name, arr in weights:
        groups.setdefault(int(arr.shape[1]), []).append((name, arr))

    packs, wmap = [], {}
    for gi, (ncols, items) in enumerate(groups.items()):
        parts, cur = [], 0
        for name, arr in items:
            wmap[name] = (gi, cur, int(arr.shape[0]))
            parts.append(jnp.asarray(arr, _W_DTYPE))
            cur += int(arr.shape[0])
            pad = (-cur) % ALIGN
            if pad:
                parts.append(jnp.zeros((pad, ncols), _W_DTYPE))
                cur += pad
        packs.append(jnp.concatenate(parts, axis=0))

    # ---- all bias / BN-shift rows in one f32 table (keeps VPU math in f32) --
    bw = max(int(v.shape[0]) for _, v in biases)
    brows, bmap = [], {}
    for r, (name, v) in enumerate(biases):
        bmap[name] = (r, int(v.shape[0]))
        brows.append(jnp.pad(jnp.asarray(v, jnp.float32),
                             (0, bw - int(v.shape[0]))))
    bias_arr = jnp.stack(brows, axis=0)

    layout = dict(
        wmap=wmap, bmap=bmap, l0=l0, c0=c0,
        num_classes=int(params["dense3"]["w"].shape[0]),
        # Defer the largest pack's DMA so it overlaps with early-stage compute.
        deferred=int(np.argmax([int(p.size) for p in packs])),
    )
    return packs, bias_arr, layout


# ------------------------------ fused kernel --------------------------------

def _make_kernel(plan, layout, batch, n_packs):
    wmap, bmap = layout["wmap"], layout["bmap"]
    l0, c0, deferred = layout["l0"], layout["c0"], layout["deferred"]
    B = batch
    bf16, f32 = jnp.bfloat16, jnp.float32

    def kernel(*refs):
        x_ref = refs[0]
        pack_refs = list(refs[1:1 + n_packs])
        bias_ref = refs[1 + n_packs]
        out_ref = refs[2 + n_packs]
        dvmem = refs[3 + n_packs]
        sem = refs[4 + n_packs]

        # Kick off the DMA of the largest (late-used) weight pack; it overlaps
        # with the dense head + early residual-stage compute and is waited on
        # lazily right before its first use.
        cp = pltpu.make_async_copy(pack_refs[deferred], dvmem, sem)
        cp.start()
        state = {"waited": False}

        def weight(name):
            gi, start, n = wmap[name]
            if gi == deferred:
                if not state["waited"]:
                    cp.wait()
                    state["waited"] = True
                ref = dvmem
            else:
                ref = pack_refs[gi]
            return ref[start:start + n, :]

        def bias(name):
            r, n = bmap[name]
            return bias_ref[r:r + 1, :n]                     # (1, n) f32

        def mm(lhs_b, w_b):
            return jnp.dot(lhs_b, w_b, preferred_element_type=f32)

        def conv3_lhs(slab_b, l_in, stride):
            """Im2col LHS for a k=3 / pad=1 conv over a position-major
            (l_in*B, Cin) slab.  Returns ((l_out*B, 3*Cin), l_out)."""
            cin = slab_b.shape[1]
            z = jnp.zeros((B, cin), slab_b.dtype)
            if l_in > 1:
                left = jnp.concatenate([z, slab_b[:-B]], axis=0)
                right = jnp.concatenate([slab_b[B:], z], axis=0)
            else:
                left, right = z, z
            full = jnp.concatenate([left, slab_b, right], axis=1)
            if stride == 1:
                return full, l_in
            l_out = (l_in - 1) // stride + 1
            rows = [full[stride * l * B:stride * l * B + B] for l in range(l_out)]
            sel = rows[0] if len(rows) == 1 else jnp.concatenate(rows, axis=0)
            return sel, l_out

        # ---- bn_d0 + dense1 + bn_d1 + ReLU (one matmul, columns (l, c)) -----
        h = mm(x_ref[...].astype(bf16), weight("a1"))
        h = jnp.maximum(h + bias("c1"), 0.0)                 # (B, l0*c0) f32

        # Position-major, channels-last activation slab: row = l*B + b.
        slab = jnp.concatenate(
            [h[:, l * c0:(l + 1) * c0] for l in range(l0)], axis=0)   # (l0*B, c0)

        # ----------------------- residual stages -----------------------------
        l_cur = l0
        for i, blk in enumerate(plan):
            cin, s = blk["cin"], blk["stride"]

            slab_b = slab.astype(bf16)
            lhs1, l_out = conv3_lhs(slab_b, l_cur, s)

            # conv1(k=3, stride=s, pad=1) + bn1 + ReLU (dropout == identity)
            h1 = jnp.maximum(mm(lhs1, weight(f"w1_{i}")) + bias(f"b1_{i}"), 0.0)

            # conv2(k=3, stride=1, pad=1) + bn2
            lhs2, _ = conv3_lhs(h1.astype(bf16), l_out, 1)
            h2 = mm(lhs2, weight(f"w2_{i}")) + bias(f"b2_{i}")

            # shortcut: 1x1 stride-s conv + BN, or identity.  The strided
            # center tap of lhs1 is exactly the downsample LHS.
            if blk["down"]:
                sc = mm(lhs1[:, cin:2 * cin], weight(f"wd_{i}")) + bias(f"bd_{i}")
            else:
                sc = slab

            slab = jnp.maximum(h2 + sc, 0.0)
            l_cur = l_out

        # ---- AvgPool1d(2) over positions (whole-slab VPU op) ----------------
        lp = l_cur // 2
        pooled = [(slab[2 * p * B:(2 * p + 1) * B]
                   + slab[(2 * p + 1) * B:(2 * p + 2) * B]) * 0.5
                  for p in range(lp)]
        # Back to batch-major rows; dense2's rows were permuted at prep time to
        # match this (position, channel) column order (Flatten baked in).
        hd_in = pooled[0] if lp == 1 else jnp.concatenate(pooled, axis=1)

        # ---- dense2 + bn_d2 + ReLU ----
        hd = jnp.maximum(mm(hd_in.astype(bf16), weight("a2")) + bias("c2"), 0.0)

        # ---- dense3 ----
        logits = mm(hd.astype(bf16), weight("a3")) + bias("c3")

        if not state["waited"]:    # safety: never leave the DMA un-awaited
            cp.wait()
        out_ref[...] = logits.astype(out_ref.dtype)

    return kernel


def make_fused_forward(plan, layout, batch, pack_shapes):
    n_packs = len(pack_shapes)
    deferred = layout["deferred"]
    num_classes = layout["num_classes"]
    kernel = _make_kernel(plan, layout, batch, n_packs)

    vmem = pl.BlockSpec(memory_space=pltpu.MemorySpace.VMEM)
    anys = pl.BlockSpec(memory_space=pl.ANY)
    in_specs = [vmem]                                              # x
    in_specs += [anys if gi == deferred else vmem for gi in range(n_packs)]
    in_specs += [vmem]                                             # bias table

    def fwd(x, *ops):
        return pl.pallas_call(
            kernel,
            out_shape=jax.ShapeDtypeStruct((batch, num_classes), jnp.float32),
            in_specs=in_specs,
            out_specs=vmem,
            scratch_shapes=[pltpu.VMEM(pack_shapes[deferred], _W_DTYPE),
                            pltpu.SemaphoreType.DMA],
            compiler_params=pltpu.CompilerParams(
                vmem_limit_bytes=32 * 1024 * 1024),
        )(x, *ops)

    return fwd


# --------------------------- pure-JAX reference ------------------------------

def _reference_forward(params, x):
    """Direct transcription of the PyTorch eval-mode forward (for checking)."""
    def bn2d(h, p):
        s, t = bn_fold(p)
        return h * s + t

    def bn_ncl(h, p):
        s, t = bn_fold(p)
        return h * s[None, :, None] + t[None, :, None]

    def conv(h, w, stride, pad):
        return jax.lax.conv_general_dilated(
            h, w, window_strides=(stride,), padding=[(pad, pad)],
            dimension_numbers=("NCH", "OIH", "NCH"))

    h = bn2d(x, params["bn_d0"])
    h = h @ params["dense1"]["w"].T + params["dense1"]["b"]
    h = jnp.maximum(bn2d(h, params["bn_d1"]), 0.0)
    h = h.reshape(x.shape[0], 64, -1)                              # NCL

    blocks = (list(params["layer1"]) + list(params["layer2"])
              + list(params["layer3"]))
    for blk, p in zip(_build_plan(), blocks):
        s = blk["stride"]
        o = jnp.maximum(bn_ncl(conv(h, p["conv1_w"], s, 1), p["bn1"]), 0.0)
        o = bn_ncl(conv(o, p["conv2_w"], 1, 1), p["bn2"])
        sc = (bn_ncl(conv(h, p["down_w"], s, 0), p["down_bn"])
              if blk["down"] else h)
        h = jnp.maximum(o + sc, 0.0)

    B, C, L = h.shape
    h = h.reshape(B, C, L // 2, 2).mean(axis=3).reshape(B, -1)     # AvgPool + Flatten
    h = jnp.maximum(bn2d(h @ params["dense2"]["w"].T + params["dense2"]["b"],
                         params["bn_d2"]), 0.0)
    return h @ params["dense3"]["w"].T + params["dense3"]["b"]


# --------------------------- parameter creation ------------------------------

def init_params(key, num_feature=130, h1=512, h2=256, num_classes=5,
                layers=(1, 1, 1)):
    counter = [0]

    def nk():
        counter[0] += 1
        return jax.random.fold_in(key, counter[0])

    def bn_init(c):
        return dict(
            gamma=jax.random.uniform(nk(), (c,), minval=0.5, maxval=1.5),
            beta=0.1 * jax.random.normal(nk(), (c,)),
            mean=0.1 * jax.random.normal(nk(), (c,)),
            var=jax.random.uniform(nk(), (c,), minval=0.5, maxval=1.5),
        )

    def lin_init(cin, cout):
        return dict(
            w=jax.random.normal(nk(), (cout, cin)) * (cin ** -0.5),
            b=0.01 * jax.random.normal(nk(), (cout,)),
        )

    def conv_init(cin, cout, k):
        return jax.random.normal(nk(), (cout, cin, k)) * ((cin * k) ** -0.5)

    inplanes = 64

    def make_layer(planes, nblocks, stride):
        nonlocal inplanes
        blocks = []
        for i in range(nblocks):
            p = dict(
                conv1_w=conv_init(inplanes, planes, 3),
                bn1=bn_init(planes),
                conv2_w=conv_init(planes, planes, 3),
                bn2=bn_init(planes),
            )
            if i == 0 and stride > 1:
                p["down_w"] = conv_init(inplanes, planes, 1)
                p["down_bn"] = bn_init(planes)
            blocks.append(p)
            inplanes = planes
        return blocks

    return dict(
        bn_d0=bn_init(num_feature),
        dense1=lin_init(num_feature, h1),
        bn_d1=bn_init(h1),
        layer1=make_layer(64, layers[0], 1),
        layer2=make_layer(128, layers[1], 2),
        layer3=make_layer(256, layers[2], 2),
        dense2=lin_init(h1 // 2, h2),
        bn_d2=bn_init(h2),
        dense3=lin_init(h2, num_classes),
    )


# ---------------------------------- main -------------------------------------

if __name__ == "__main__":
    key = jax.random.PRNGKey(0)
    # layers=[1,1,1] (one ResidualBlock per stage), batch=2, num_feature=130
    params = init_params(key, layers=(1, 1, 1))
    x = jax.random.normal(jax.random.fold_in(key, 12345), (2, 130),
                          dtype=jnp.float32)

    plan = _build_plan((1, 1, 1))
    # One-time prep (BN folding, transposes, layout permutations, bf16 casting,
    # DMA coalescing) — hoisted out of the per-forward hot path.
    packs, bias_arr, layout = prepare_inputs(params, plan)
    pack_shapes = [tuple(int(d) for d in p.shape) for p in packs]

    fwd = jax.jit(make_fused_forward(plan, layout, batch=int(x.shape[0]),
                                     pack_shapes=pack_shapes))
    out = jax.block_until_ready(fwd(x, *packs, bias_arr))

    assert out.shape == (2, layout["num_classes"]), out.shape
    assert bool(jnp.all(jnp.isfinite(out)))

    # Check the fused bf16-weight kernel against an exact f32 pure-JAX
    # transcription of the PyTorch eval-mode forward (bf16 operands with f32
    # accumulation -> slightly looser atol).
    with jax.default_matmul_precision("highest"):
        ref = _reference_forward(params, x)
    np.testing.assert_allclose(np.asarray(out), np.asarray(ref),
                               rtol=5e-2, atol=1e-1)

    print("KERNEL_OK")
</pallas_src>

<mosaic_0001>
module attributes {stable_mosaic.version = 11 : i64} {
  func.func @kernel(%arg0: memref<2x130xf32, #tpu.memory_space<vmem>>, %arg1: memref<144x512xbf16, #tpu.memory_space<vmem>>, %arg2: memref<384x64xbf16, #tpu.memory_space<vmem>>, %arg3: memref<640x128xbf16, #tpu.memory_space<vmem>>, %arg4: memref<1536x256xbf16, #tpu.memory_space<any>>, %arg5: memref<256x5xbf16, #tpu.memory_space<vmem>>, %arg6: memref<11x512xf32, #tpu.memory_space<vmem>>, %arg7: memref<2x5xf32, #tpu.memory_space<vmem>>, %arg8: memref<1536x256xbf16, #tpu.memory_space<vmem>>, %arg9: memref<!tpu.dma_semaphore, #tpu.memory_space<semaphore_mem>>) attributes {dimension_semantics = [], scalar_prefetch = 0 : i64, scratch_operands = 2 : i64, tpu.core_type = #tpu.core_type<tc>} {
    tpu.enqueue_dma source(%arg4 : memref<1536x256xbf16, #tpu.memory_space<any>>) target(%arg8 : memref<1536x256xbf16, #tpu.memory_space<vmem>>) target_semaphore(%arg9 : memref<!tpu.dma_semaphore, #tpu.memory_space<semaphore_mem>>)
    %c0 = arith.constant 0 : index
    %c0_0 = arith.constant 0 : index
    %0 = vector.load %arg0[%c0, %c0_0] : memref<2x130xf32, #tpu.memory_space<vmem>>, vector<2x130xf32>
    %1 = arith.truncf %0 : vector<2x130xf32> to vector<2x130xbf16>
    %c0_1 = arith.constant 0 : index
    %c0_2 = arith.constant 0 : index
    %2 = vector.load %arg1[%c0_1, %c0_2] : memref<144x512xbf16, #tpu.memory_space<vmem>>, vector<130x512xbf16>
    %cst = arith.constant dense<0.000000e+00> : vector<2x512xf32>
    %3 = tpu.matmul %1, %2, %cst {dimension_numbers = #tpu.dot_dimension_numbers<[1], [0], [0], [1], [0, 0, 1, 1], [], []>} : vector<2x130xbf16>, vector<130x512xbf16>, vector<2x512xf32> -> vector<2x512xf32>
    %c0_3 = arith.constant 0 : index
    %c0_4 = arith.constant 0 : index
    %4 = vector.load %arg6[%c0_3, %c0_4] : memref<11x512xf32, #tpu.memory_space<vmem>>, vector<1x512xf32>
    %5 = vector.broadcast %4 : vector<1x512xf32> to vector<2x512xf32>
    %6 = arith.addf %3, %5 : vector<2x512xf32>
    %cst_5 = arith.constant 0.000000e+00 : f32
    %7 = vector.broadcast %cst_5 : f32 to vector<2x512xf32>
    %8 = arith.maximumf %6, %7 : vector<2x512xf32>
    %9 = vector.extract_strided_slice %8 {offsets = [0, 0], sizes = [2, 64], strides = [1, 1]} : vector<2x512xf32> to vector<2x64xf32>
    %10 = vector.extract_strided_slice %8 {offsets = [0, 64], sizes = [2, 64], strides = [1, 1]} : vector<2x512xf32> to vector<2x64xf32>
    %11 = vector.extract_strided_slice %8 {offsets = [0, 128], sizes = [2, 64], strides = [1, 1]} : vector<2x512xf32> to vector<2x64xf32>
    %12 = vector.extract_strided_slice %8 {offsets = [0, 192], sizes = [2, 64], strides = [1, 1]} : vector<2x512xf32> to vector<2x64xf32>
    %13 = vector.extract_strided_slice %8 {offsets = [0, 256], sizes = [2, 64], strides = [1, 1]} : vector<2x512xf32> to vector<2x64xf32>
    %14 = vector.extract_strided_slice %8 {offsets = [0, 320], sizes = [2, 64], strides = [1, 1]} : vector<2x512xf32> to vector<2x64xf32>
    %15 = vector.extract_strided_slice %8 {offsets = [0, 384], sizes = [2, 64], strides = [1, 1]} : vector<2x512xf32> to vector<2x64xf32>
    %16 = vector.extract_strided_slice %8 {offsets = [0, 448], sizes = [2, 64], strides = [1, 1]} : vector<2x512xf32> to vector<2x64xf32>
    %17 = tpu.concatenate %9, %10, %11, %12, %13, %14, %15, %16 in 0 : vector<2x64xf32>, vector<2x64xf32>, vector<2x64xf32>, vector<2x64xf32>, vector<2x64xf32>, vector<2x64xf32>, vector<2x64xf32>, vector<2x64xf32> -> vector<16x64xf32>
    %18 = arith.truncf %17 : vector<16x64xf32> to vector<16x64xbf16>
    %cst_6 = arith.constant 0.000000e+00 : bf16
    %19 = vector.broadcast %cst_6 : bf16 to vector<2x64xbf16>
    %20 = vector.extract_strided_slice %18 {offsets = [0, 0], sizes = [14, 64], strides = [1, 1]} : vector<16x64xbf16> to vector<14x64xbf16>
    %21 = tpu.concatenate %19, %20 in 0 : vector<2x64xbf16>, vector<14x64xbf16> -> vector<16x64xbf16>
    %22 = vector.extract_strided_slice %18 {offsets = [2, 0], sizes = [14, 64], strides = [1, 1]} : vector<16x64xbf16> to vector<14x64xbf16>
    %23 = tpu.concatenate %22, %19 in 0 : vector<14x64xbf16>, vector<2x64xbf16> -> vector<16x64xbf16>
    %24 = tpu.concatenate %21, %18, %23 in 1 : vector<16x64xbf16>, vector<16x64xbf16>, vector<16x64xbf16> -> vector<16x192xbf16>
    %c0_7 = arith.constant 0 : index
    %c0_8 = arith.constant 0 : index
    %25 = vector.load %arg2[%c0_7, %c0_8] : memref<384x64xbf16, #tpu.memory_space<vmem>>, vector<192x64xbf16>
    %cst_9 = arith.constant dense<0.000000e+00> : vector<16x64xf32>
    %26 = tpu.matmul %24, %25, %cst_9 {dimension_numbers = #tpu.dot_dimension_numbers<[1], [0], [0], [1], [0, 0, 1, 1], [], []>} : vector<16x192xbf16>, vector<192x64xbf16>, vector<16x64xf32> -> vector<16x64xf32>
    %c1 = arith.constant 1 : index
    %c0_10 = arith.constant 0 : index
    %27 = vector.load %arg6[%c1, %c0_10] : memref<11x512xf32, #tpu.memory_space<vmem>>, vector<1x64xf32>
    %28 = vector.broadcast %27 : vector<1x64xf32> to vector<16x64xf32>
    %29 = arith.addf %26, %28 : vector<16x64xf32>
    %cst_11 = arith.constant 0.000000e+00 : f32
    %30 = vector.broadcast %cst_11 : f32 to vector<16x64xf32>
    %31 = arith.maximumf %29, %30 : vector<16x64xf32>
    %32 = arith.truncf %31 : vector<16x64xf32> to vector<16x64xbf16>
    %cst_12 = arith.constant 0.000000e+00 : bf16
    %33 = vector.broadcast %cst_12 : bf16 to vector<2x64xbf16>
    %34 = vector.extract_strided_slice %32 {offsets = [0, 0], sizes = [14, 64], strides = [1, 1]} : vector<16x64xbf16> to vector<14x64xbf16>
    %35 = tpu.concatenate %33, %34 in 0 : vector<2x64xbf16>, vector<14x64xbf16> -> vector<16x64xbf16>
    %36 = vector.extract_strided_slice %32 {offsets = [2, 0], sizes = [14, 64], strides = [1, 1]} : vector<16x64xbf16> to vector<14x64xbf16>
    %37 = tpu.concatenate %36, %33 in 0 : vector<14x64xbf16>, vector<2x64xbf16> -> vector<16x64xbf16>
    %38 = tpu.concatenate %35, %32, %37 in 1 : vector<16x64xbf16>, vector<16x64xbf16>, vector<16x64xbf16> -> vector<16x192xbf16>
    %c192 = arith.constant 192 : index
    %c0_13 = arith.constant 0 : index
    %39 = vector.load %arg2[%c192, %c0_13] : memref<384x64xbf16, #tpu.memory_space<vmem>>, vector<192x64xbf16>
    %cst_14 = arith.constant dense<0.000000e+00> : vector<16x64xf32>
    %40 = tpu.matmul %38, %39, %cst_14 {dimension_numbers = #tpu.dot_dimension_numbers<[1], [0], [0], [1], [0, 0, 1, 1], [], []>} : vector<16x192xbf16>, vector<192x64xbf16>, vector<16x64xf32> -> vector<16x64xf32>
    %c2 = arith.constant 2 : index
    %c0_15 = arith.constant 0 : index
    %41 = vector.load %arg6[%c2, %c0_15] : memref<11x512xf32, #tpu.memory_space<vmem>>, vector<1x64xf32>
    %42 = vector.broadcast %41 : vector<1x64xf32> to vector<16x64xf32>
    %43 = arith.addf %40, %42 : vector<16x64xf32>
    %44 = arith.addf %43, %17 : vector<16x64xf32>
    %cst_16 = arith.constant 0.000000e+00 : f32
    %45 = vector.broadcast %cst_16 : f32 to vector<16x64xf32>
    %46 = arith.maximumf %44, %45 : vector<16x64xf32>
    %47 = arith.truncf %46 : vector<16x64xf32> to vector<16x64xbf16>
    %cst_17 = arith.constant 0.000000e+00 : bf16
    %48 = vector.broadcast %cst_17 : bf16 to vector<2x64xbf16>
    %49 = vector.extract_strided_slice %47 {offsets = [0, 0], sizes = [14, 64], strides = [1, 1]} : vector<16x64xbf16> to vector<14x64xbf16>
    %50 = tpu.concatenate %48, %49 in 0 : vector<2x64xbf16>, vector<14x64xbf16> -> vector<16x64xbf16>
    %51 = vector.extract_strided_slice %47 {offsets = [2, 0], sizes = [14, 64], strides = [1, 1]} : vector<16x64xbf16> to vector<14x64xbf16>
    %52 = tpu.concatenate %51, %48 in 0 : vector<14x64xbf16>, vector<2x64xbf16> -> vector<16x64xbf16>
    %53 = tpu.concatenate %50, %47, %52 in 1 : vector<16x64xbf16>, vector<16x64xbf16>, vector<16x64xbf16> -> vector<16x192xbf16>
    %54 = vector.extract_strided_slice %53 {offsets = [0, 0], sizes = [2, 192], strides = [1, 1]} : vector<16x192xbf16> to vector<2x192xbf16>
    %55 = vector.extract_strided_slice %53 {offsets = [4, 0], sizes = [2, 192], strides = [1, 1]} : vector<16x192xbf16> to vector<2x192xbf16>
    %56 = vector.extract_strided_slice %53 {offsets = [8, 0], sizes = [2, 192], strides = [1, 1]} : vector<16x192xbf16> to vector<2x192xbf16>
    %57 = vector.extract_strided_slice %53 {offsets = [12, 0], sizes = [2, 192], strides = [1, 1]} : vector<16x192xbf16> to vector<2x192xbf16>
    %58 = tpu.concatenate %54, %55, %56, %57 in 0 : vector<2x192xbf16>, vector<2x192xbf16>, vector<2x192xbf16>, vector<2x192xbf16> -> vector<8x192xbf16>
    %c0_18 = arith.constant 0 : index
    %c0_19 = arith.constant 0 : index
    %59 = vector.load %arg3[%c0_18, %c0_19] : memref<640x128xbf16, #tpu.memory_space<vmem>>, vector<192x128xbf16>
    %cst_20 = arith.constant dense<0.000000e+00> : vector<8x128xf32>
    %60 = tpu.matmul %58, %59, %cst_20 {dimension_numbers = #tpu.dot_dimension_numbers<[1], [0], [0], [1], [0, 0, 1, 1], [], []>} : vector<8x192xbf16>, vector<192x128xbf16>, vector<8x128xf32> -> vector<8x128xf32>
    %c3 = arith.constant 3 : index
    %c0_21 = arith.constant 0 : index
    %61 = vector.load %arg6[%c3, %c0_21] : memref<11x512xf32, #tpu.memory_space<vmem>>, vector<1x128xf32>
    %62 = vector.broadcast %61 : vector<1x128xf32> to vector<8x128xf32>
    %63 = arith.addf %60, %62 : vector<8x128xf32>
    %cst_22 = arith.constant 0.000000e+00 : f32
    %64 = vector.broadcast %cst_22 : f32 to vector<8x128xf32>
    %65 = arith.maximumf %63, %64 : vector<8x128xf32>
    %66 = arith.truncf %65 : vector<8x128xf32> to vector<8x128xbf16>
    %cst_23 = arith.constant 0.000000e+00 : bf16
    %67 = vector.broadcast %cst_23 : bf16 to vector<2x128xbf16>
    %68 = vector.extract_strided_slice %66 {offsets = [0, 0], sizes = [6, 128], strides = [1, 1]} : vector<8x128xbf16> to vector<6x128xbf16>
    %69 = tpu.concatenate %67, %68 in 0 : vector<2x128xbf16>, vector<6x128xbf16> -> vector<8x128xbf16>
    %70 = vector.extract_strided_slice %66 {offsets = [2, 0], sizes = [6, 128], strides = [1, 1]} : vector<8x128xbf16> to vector<6x128xbf16>
    %71 = tpu.concatenate %70, %67 in 0 : vector<6x128xbf16>, vector<2x128xbf16> -> vector<8x128xbf16>
    %72 = tpu.concatenate %69, %66, %71 in 1 : vector<8x128xbf16>, vector<8x128xbf16>, vector<8x128xbf16> -> vector<8x384xbf16>
    %c192_24 = arith.constant 192 : index
    %c0_25 = arith.constant 0 : index
    %73 = vector.load %arg3[%c192_24, %c0_25] : memref<640x128xbf16, #tpu.memory_space<vmem>>, vector<384x128xbf16>
    %cst_26 = arith.constant dense<0.000000e+00> : vector<8x128xf32>
    %74 = tpu.matmul %72, %73, %cst_26 {dimension_numbers = #tpu.dot_dimension_numbers<[1], [0], [0], [1], [0, 0, 1, 1], [], []>} : vector<8x384xbf16>, vector<384x128xbf16>, vector<8x128xf32> -> vector<8x128xf32>
    %c4 = arith.constant 4 : index
    %c0_27 = arith.constant 0 : index
    %75 = vector.load %arg6[%c4, %c0_27] : memref<11x512xf32, #tpu.memory_space<vmem>>, vector<1x128xf32>
    %76 = vector.broadcast %75 : vector<1x128xf32> to vector<8x128xf32>
    %77 = arith.addf %74, %76 : vector<8x128xf32>
    %78 = vector.extract_strided_slice %58 {offsets = [0, 64], sizes = [8, 64], strides = [1, 1]} : vector<8x192xbf16> to vector<8x64xbf16>
    %c576 = arith.constant 576 : index
    %c0_28 = arith.constant 0 : index
    %79 = vector.load %arg3[%c576, %c0_28] : memref<640x128xbf16, #tpu.memory_space<vmem>>, vector<64x128xbf16>
    %cst_29 = arith.constant dense<0.000000e+00> : vector<8x128xf32>
    %80 = tpu.matmul %78, %79, %cst_29 {dimension_numbers = #tpu.dot_dimension_numbers<[1], [0], [0], [1], [0, 0, 1, 1], [], []>} : vector<8x64xbf16>, vector<64x128xbf16>, vector<8x128xf32> -> vector<8x128xf32>
    %c5 = arith.constant 5 : index
    %c0_30 = arith.constant 0 : index
    %81 = vector.load %arg6[%c5, %c0_30] : memref<11x512xf32, #tpu.memory_space<vmem>>, vector<1x128xf32>
    %82 = vector.broadcast %81 : vector<1x128xf32> to vector<8x128xf32>
    %83 = arith.addf %80, %82 : vector<8x128xf32>
    %84 = arith.addf %77, %83 : vector<8x128xf32>
    %cst_31 = arith.constant 0.000000e+00 : f32
    %85 = vector.broadcast %cst_31 : f32 to vector<8x128xf32>
    %86 = arith.maximumf %84, %85 : vector<8x128xf32>
    %87 = arith.truncf %86 : vector<8x128xf32> to vector<8x128xbf16>
    %cst_32 = arith.constant 0.000000e+00 : bf16
    %88 = vector.broadcast %cst_32 : bf16 to vector<2x128xbf16>
    %89 = vector.extract_strided_slice %87 {offsets = [0, 0], sizes = [6, 128], strides = [1, 1]} : vector<8x128xbf16> to vector<6x128xbf16>
    %90 = tpu.concatenate %88, %89 in 0 : vector<2x128xbf16>, vector<6x128xbf16> -> vector<8x128xbf16>
    %91 = vector.extract_strided_slice %87 {offsets = [2, 0], sizes = [6, 128], strides = [1, 1]} : vector<8x128xbf16> to vector<6x128xbf16>
    %92 = tpu.concatenate %91, %88 in 0 : vector<6x128xbf16>, vector<2x128xbf16> -> vector<8x128xbf16>
    %93 = tpu.concatenate %90, %87, %92 in 1 : vector<8x128xbf16>, vector<8x128xbf16>, vector<8x128xbf16> -> vector<8x384xbf16>
    %94 = vector.extract_strided_slice %93 {offsets = [0, 0], sizes = [2, 384], strides = [1, 1]} : vector<8x384xbf16> to vector<2x384xbf16>
    %95 = vector.extract_strided_slice %93 {offsets = [4, 0], sizes = [2, 384], strides = [1, 1]} : vector<8x384xbf16> to vector<2x384xbf16>
    %96 = tpu.concatenate %94, %95 in 0 : vector<2x384xbf16>, vector<2x384xbf16> -> vector<4x384xbf16>
    tpu.wait_dma2 semaphore(%arg9 : memref<!tpu.dma_semaphore, #tpu.memory_space<semaphore_mem>>) src(%arg4 : memref<1536x256xbf16, #tpu.memory_space<any>>) dst(%arg8 : memref<1536x256xbf16, #tpu.memory_space<vmem>>)
    %c0_33 = arith.constant 0 : index
    %c0_34 = arith.constant 0 : index
    %97 = vector.load %arg8[%c0_33, %c0_34] : memref<1536x256xbf16, #tpu.memory_space<vmem>>, vector<384x256xbf16>
    %cst_35 = arith.constant dense<0.000000e+00> : vector<4x256xf32>
    %98 = tpu.matmul %96, %97, %cst_35 {dimension_numbers = #tpu.dot_dimension_numbers<[1], [0], [0], [1], [0, 0, 1, 1], [], []>} : vector<4x384xbf16>, vector<384x256xbf16>, vector<4x256xf32> -> vector<4x256xf32>
    %c6 = arith.constant 6 : index
    %c0_36 = arith.constant 0 : index
    %99 = vector.load %arg6[%c6, %c0_36] : memref<11x512xf32, #tpu.memory_space<vmem>>, vector<1x256xf32>
    %100 = vector.broadcast %99 : vector<1x256xf32> to vector<4x256xf32>
    %101 = arith.addf %98, %100 : vector<4x256xf32>
    %cst_37 = arith.constant 0.000000e+00 : f32
    %102 = vector.broadcast %cst_37 : f32 to vector<4x256xf32>
    %103 = arith.maximumf %101, %102 : vector<4x256xf32>
    %104 = arith.truncf %103 : vector<4x256xf32> to vector<4x256xbf16>
    %cst_38 = arith.constant 0.000000e+00 : bf16
    %105 = vector.broadcast %cst_38 : bf16 to vector<2x256xbf16>
    %106 = vector.extract_strided_slice %104 {offsets = [0, 0], sizes = [2, 256], strides = [1, 1]} : vector<4x256xbf16> to vector<2x256xbf16>
    %107 = tpu.concatenate %105, %106 in 0 : vector<2x256xbf16>, vector<2x256xbf16> -> vector<4x256xbf16>
    %108 = vector.extract_strided_slice %104 {offsets = [2, 0], sizes = [2, 256], strides = [1, 1]} : vector<4x256xbf16> to vector<2x256xbf16>
    %109 = tpu.concatenate %108, %105 in 0 : vector<2x256xbf16>, vector<2x256xbf16> -> vector<4x256xbf16>
    %110 = tpu.concatenate %107, %104, %109 in 1 : vector<4x256xbf16>, vector<4x256xbf16>, vector<4x256xbf16> -> vector<4x768xbf16>
    %c384 = arith.constant 384 : index
    %c0_39 = arith.constant 0 : index
    %111 = vector.load %arg8[%c384, %c0_39] : memref<1536x256xbf16, #tpu.memory_space<vmem>>, vector<768x256xbf16>
    %cst_40 = arith.constant dense<0.000000e+00> : vector<4x256xf32>
    %112 = tpu.matmul %110, %111, %cst_40 {dimension_numbers = #tpu.dot_dimension_numbers<[1], [0], [0], [1], [0, 0, 1, 1], [], []>} : vector<4x768xbf16>, vector<768x256xbf16>, vector<4x256xf32> -> vector<4x256xf32>
    %c7 = arith.constant 7 : index
    %c0_41 = arith.constant 0 : index
    %113 = vector.load %arg6[%c7, %c0_41] : memref<11x512xf32, #tpu.memory_space<vmem>>, vector<1x256xf32>
    %114 = vector.broadcast %113 : vector<1x256xf32> to vector<4x256xf32>
    %115 = arith.addf %112, %114 : vector<4x256xf32>
    %116 = vector.extract_strided_slice %96 {offsets = [0, 128], sizes = [4, 128], strides = [1, 1]} : vector<4x384xbf16> to vector<4x128xbf16>
    %c1152 = arith.constant 1152 : index
    %c0_42 = arith.constant 0 : index
    %117 = vector.load %arg8[%c1152, %c0_42] : memref<1536x256xbf16, #tpu.memory_space<vmem>>, vector<128x256xbf16>
    %cst_43 = arith.constant dense<0.000000e+00> : vector<4x256xf32>
    %118 = tpu.matmul %116, %117, %cst_43 {dimension_numbers = #tpu.dot_dimension_numbers<[1], [0], [0], [1], [0, 0, 1, 1], [], []>} : vector<4x128xbf16>, vector<128x256xbf16>, vector<4x256xf32> -> vector<4x256xf32>
    %c8 = arith.constant 8 : index
    %c0_44 = arith.constant 0 : index
    %119 = vector.load %arg6[%c8, %c0_44] : memref<11x512xf32, #tpu.memory_space<vmem>>, vector<1x256xf32>
    %120 = vector.broadcast %119 : vector<1x256xf32> to vector<4x256xf32>
    %121 = arith.addf %118, %120 : vector<4x256xf32>
    %122 = arith.addf %115, %121 : vector<4x256xf32>
    %cst_45 = arith.constant 0.000000e+00 : f32
    %123 = vector.broadcast %cst_45 : f32 to vector<4x256xf32>
    %124 = arith.maximumf %122, %123 : vector<4x256xf32>
    %125 = vector.extract_strided_slice %124 {offsets = [0, 0], sizes = [2, 256], strides = [1, 1]} : vector<4x256xf32> to vector<2x256xf32>
    %126 = vector.extract_strided_slice %124 {offsets = [2, 0], sizes = [2, 256], strides = [1, 1]} : vector<4x256xf32> to vector<2x256xf32>
    %127 = arith.addf %125, %126 : vector<2x256xf32>
    %cst_46 = arith.constant 5.000000e-01 : f32
    %128 = vector.broadcast %cst_46 : f32 to vector<2x256xf32>
    %129 = arith.mulf %127, %128 : vector<2x256xf32>
    %130 = arith.truncf %129 : vector<2x256xf32> to vector<2x256xbf16>
    %c1280 = arith.constant 1280 : index
    %c0_47 = arith.constant 0 : index
    %131 = vector.load %arg8[%c1280, %c0_47] : memref<1536x256xbf16, #tpu.memory_space<vmem>>, vector<256x256xbf16>
    %cst_48 = arith.constant dense<0.000000e+00> : vector<2x256xf32>
    %132 = tpu.matmul %130, %131, %cst_48 {dimension_numbers = #tpu.dot_dimension_numbers<[1], [0], [0], [1], [0, 0, 1, 1], [], []>} : vector<2x256xbf16>, vector<256x256xbf16>, vector<2x256xf32> -> vector<2x256xf32>
    %c9 = arith.constant 9 : index
    %c0_49 = arith.constant 0 : index
    %133 = vector.load %arg6[%c9, %c0_49] : memref<11x512xf32, #tpu.memory_space<vmem>>, vector<1x256xf32>
    %134 = vector.broadcast %133 : vector<1x256xf32> to vector<2x256xf32>
    %135 = arith.addf %132, %134 : vector<2x256xf32>
    %cst_50 = arith.constant 0.000000e+00 : f32
    %136 = vector.broadcast %cst_50 : f32 to vector<2x256xf32>
    %137 = arith.maximumf %135, %136 : vector<2x256xf32>
    %138 = arith.truncf %137 : vector<2x256xf32> to vector<2x256xbf16>
    %c0_51 = arith.constant 0 : index
    %c0_52 = arith.constant 0 : index
    %139 = vector.load %arg5[%c0_51, %c0_52] : memref<256x5xbf16, #tpu.memory_space<vmem>>, vector<256x5xbf16>
    %cst_53 = arith.constant dense<0.000000e+00> : vector<2x5xf32>
    %140 = tpu.matmul %138, %139, %cst_53 {dimension_numbers = #tpu.dot_dimension_numbers<[1], [0], [0], [1], [0, 0, 1, 1], [], []>} : vector<2x256xbf16>, vector<256x5xbf16>, vector<2x5xf32> -> vector<2x5xf32>
    %c10 = arith.constant 10 : index
    %c0_54 = arith.constant 0 : index
    %141 = vector.load %arg6[%c10, %c0_54] : memref<11x512xf32, #tpu.memory_space<vmem>>, vector<1x5xf32>
    %142 = vector.broadcast %141 : vector<1x5xf32> to vector<2x5xf32>
    %143 = arith.addf %140, %142 : vector<2x5xf32>
    %c0_55 = arith.constant 0 : index
    %c0_56 = arith.constant 0 : index
    %144 = vector.load %arg7[%c0_55, %c0_56] : memref<2x5xf32, #tpu.memory_space<vmem>>, vector<2x5xf32>
    tpu.vector_store %arg7[%c0_55, %c0_56], %143 {strides = array<i32>} : memref<2x5xf32, #tpu.memory_space<vmem>>, vector<2x5xf32>,
    return
  }
}

</mosaic_0001>

<llo_original>
// kernel: fwd.1
$region0: #{fwd.1}
  #allocation0 [shape = 'u32[]', space=smem, size = 0x4, offset = 0x4, fixed_abs, tag = 'smem constant byte address 0x4 - core index']
  #allocation1 [shape = 'u32[72,128]{1,0:T(1,128)}', space=vmem, size = 0x9000, scoped, tag = 'internal scratch']
  #allocation2 [shape = 'bf16[1536,256]{1,0:T(8,128)(2,1)}', space=vmem, size = 0xc0000, scoped, tag = 'scratch operand']
  #allocation3 [shape = 's32[1]{0}', space=sflag, size = 0x4, scoped, tag = 'scratch operand']
  #allocation10 [shape = 's32[]', space=sflag, size = 0x4, offset = 0, fixed_abs, tag = 'sflag constant byte address 0x0 - dummy sync flag']
  #allocation11 [shape = 's32[]', space=sflag, size = 0x4, offset = 0, fixed_abs, tag = 'sflag constant byte address 0x0 - dummy sync flag']
  #allocation12 [shape = 'u32[]', space=smem, size = 0x4, offset = 0x44, fixed_abs, tag = 'smem constant byte address 0x44 - assertion arg 0']
  #allocation13 [shape = 'u32[]', space=smem, size = 0x4, offset = 0x48, fixed_abs, tag = 'smem constant byte address 0x48 - assertion arg 1']
  %s0 = inlined_call_operand.vmem [shape: f32[2,130], index: 0, kind: input, shape index: {}]
  %s1 = inlined_call_operand.hbm [shape: bf16[144,512], index: 1, kind: input, shape index: {}]
  %s2 = inlined_call_operand.vmem [shape: bf16[384,64], index: 2, kind: input, shape index: {}]
  %s3 = inlined_call_operand.vmem [shape: bf16[640,128], index: 3, kind: input, shape index: {}]
  %s4 = inlined_call_operand.hbm [shape: bf16[1536,256], index: 4, kind: input, shape index: {}]
  %s5 = inlined_call_operand.vmem [shape: bf16[256,5], index: 5, kind: input, shape index: {}]
  %s6 = inlined_call_operand.hbm [shape: f32[11,512], index: 6, kind: input, shape index: {}]
  %s7 = inlined_call_operand.hbm [shape: f32[2,5], index: 7, kind: output, shape index: {}]
  %s8 = sld [smem:[#allocation0]]
  $region46: #{fwd.1} parent=0
    _
  %s10 = ssub.s32 1, %s8
  %s11 = scalar_select 0, %s10, %s8
  $region1: #{fwd.1} parent=0
    #allocation4 [shape = 'u8[147456]{0}', space=vmem, size = 0x24000, scoped, tag = 'input window, operand 1, single buffered']
    #allocation5 [shape = 's32[1]{0}', space=sflag, size = 0x4, scoped, tag = 'scoped memory for fwd.1']
    #allocation6 [shape = 's32[1]{0}', space=sflag, size = 0x4, scoped, tag = 'scoped memory for fwd.1']
    #allocation7 [shape = 'u8[32768]{0}', space=vmem, size = 0x8000, scoped, tag = 'input window, operand 6, single buffered']
    #allocation8 [shape = 's32[1]{0}', space=sflag, size = 0x4, scoped, tag = 'scoped memory for fwd.1']
    #allocation9 [shape = 'u8[1024]{0}', space=vmem, size = 0x400, scoped, tag = 'output window, operand 0, single buffered']
    %12 = vsyncpa [#allocation5], 0
    %13 = vsyncpa [#allocation8], 0
    %14 = vsyncpa [#allocation6], 0
    // Predicated region
    $region2: #{fwd.1} parent=1 // pred_check
      _
    $region3: #{fwd.1} parent=1 // pred_check_branch
      %16 = sbr.rel (0) target = $region5
    $region4: #{fwd.1} parent=1 // pred_region
      _
    $region5: #{fwd.1} parent=1 // pred_fallthru
      _
    // Predicated region
    $region6: #{fwd.1} parent=1 // pred_check
      _
    $region7: #{fwd.1} parent=1 // pred_check_branch
      %18 = sbr.rel (0) target = $region9
    $region8: #{fwd.1} parent=1 // pred_region
      %20 = vsyncadd [#allocation5], 0
      %s21 = sshll.u32 %s1, 4
      %s22 = int_to_ptr.hbm [resolvable:$true] %s21
      %s23 = sshll.u32 [#allocation4], 4
      %s24 = int_to_ptr.vmem [resolvable:$true] %s23
      %29 = dma.hbm_to_vmem [thread:$0]  %s22, 4608, %s24, [#allocation5], 256, 256, 16
    $region9: #{fwd.1} parent=1 // pred_fallthru
      _
    // Predicated region
    $region10: #{fwd.1} parent=1 // pred_check
      _
    $region11: #{fwd.1} parent=1 // pred_check_branch
      %31 = sbr.rel (0) target = $region13
    $region12: #{fwd.1} parent=1 // pred_region
      _
    $region13: #{fwd.1} parent=1 // pred_fallthru
      _
    // Predicated region
    $region14: #{fwd.1} parent=1 // pred_check
      _
    $region15: #{fwd.1} parent=1 // pred_check_branch
      %33 = sbr.rel (0) target = $region17
    $region16: #{fwd.1} parent=1 // pred_region
      _
    $region17: #{fwd.1} parent=1 // pred_fallthru
      _
    // Predicated region
    $region18: #{fwd.1} parent=1 // pred_check
      _
    $region19: #{fwd.1} parent=1 // pred_check_branch
      %35 = sbr.rel (0) target = $region21
    $region20: #{fwd.1} parent=1 // pred_region
      _
    $region21: #{fwd.1} parent=1 // pred_fallthru
      _
    // Predicated region
    $region22: #{fwd.1} parent=1 // pred_check
      _
    $region23: #{fwd.1} parent=1 // pred_check_branch
      %37 = sbr.rel (0) target = $region25
    $region24: #{fwd.1} parent=1 // pred_region
      %39 = vsyncadd [#allocation8], 0
      %s40 = sshll.u32 %s6, 4
      %s41 = int_to_ptr.hbm [resolvable:$true] %s40
      %s42 = sshll.u32 [#allocation7], 4
      %s43 = int_to_ptr.vmem [resolvable:$true] %s42
      %48 = dma.hbm_to_vmem [thread:$0]  %s41, 1024, %s43, [#allocation8], 512, 512, 32
    $region25: #{fwd.1} parent=1 // pred_fallthru
      _
    // Predicated region
    $region26: #{fwd.1} parent=1 // pred_check
      _
    $region27: #{fwd.1} parent=1 // pred_check_branch
      %50 = sbr.rel (0) target = $region29
    $region28: #{fwd.1} parent=1 // pred_region
      %52 = dma.done [#allocation5], 4608
    $region29: #{fwd.1} parent=1 // pred_fallthru
      _
    // Predicated region
    $region30: #{fwd.1} parent=1 // pred_check
      _
    $region31: #{fwd.1} parent=1 // pred_check_branch
      %54 = sbr.rel (0) target = $region33
    $region32: #{fwd.1} parent=1 // pred_region
      %56 = dma.done [#allocation8], 1024
    $region33: #{fwd.1} parent=1 // pred_fallthru
      _
    // Predicated region
    $region34: #{fwd.1} parent=1 // pred_check
      _
    $region35: #{fwd.1} parent=1 // pred_check_branch
      %59 = sbr.rel target = $region37
    $region36: #{fwd.1} parent=1 // pred_region
      %60 = sst [smem:[#allocation12]] [#allocation11]
      %61 = sst [smem:[#allocation13]] [#allocation10]
    $region37: #{fwd.1} parent=1 // pred_fallthru
      _
    %63 = shalt.err (0)
    %s65 = sshll.u32 %s4, 4
    %s66 = int_to_ptr.hbm [resolvable:$true] %s65
    %s67 = sshll.u32 [#allocation2], 4
    %s68 = int_to_ptr.vmem [resolvable:$true] %s67
    %70 = dma.hbm_to_vmem [thread:$0]  %s66, 24576, %s68, [#allocation3]
    %v71 = vld [vmem:[%s0] sm:$0xf]
    %73 = vst [vmem:[#allocation1] ss:$4 sm:$0xff] %v71
    %v74 = vld.sshfl [vmem:[#allocation1] sm:$0xff pattern:$0x73625140]
    %v75 = vld.sshfl [vmem:[#allocation1 + $0x8] sm:$0xff pattern:$0x73625140]
    %v78 = vpack.c.bf16 %v74, %v74
    %v79 = vpack.c.bf16 %v75, %v75
    %v80 = vld [vmem:[#allocation4] sm:$0xff]
    %v81 = vld [vmem:[#allocation4 + $0x8] sm:$0xff]
    %v82 = vld [vmem:[#allocation4 + $0x10] sm:$0xff]
    %v83 = vld [vmem:[#allocation4 + $0x18] sm:$0xff]
    %v84 = vld [vmem:[#allocation4 + $0x20] sm:$0xff]
    %v85 = vld [vmem:[#allocation4 + $0x28] sm:$0xff]
    %v86 = vld [vmem:[#allocation4 + $0x30] sm:$0xff]
    %v87 = vld [vmem:[#allocation4 + $0x38] sm:$0xff]
    %v88 = vld [vmem:[#allocation4 + $0x40] sm:$0xff]
    %v89 = vld [vmem:[#allocation4 + $0x48] sm:$0xff]
    %v90 = vld [vmem:[#allocation4 + $0x50] sm:$0xff]
    %v91 = vld [vmem:[#allocation4 + $0x58] sm:$0xff]
    %v92 = vld [vmem:[#allocation4 + $0x60] sm:$0xff]
    %v93 = vld [vmem:[#allocation4 + $0x68] sm:$0xff]
    %v94 = vld [vmem:[#allocation4 + $0x70] sm:$0xff]
    %v95 = vld [vmem:[#allocation4 + $0x78] sm:$0xff]
    %v96 = vld [vmem:[#allocation4 + $0x80] sm:$0xff]
    %v97 = vld [vmem:[#allocation4 + $0x88] sm:$0xff]
    %v98 = vld [vmem:[#allocation4 + $0x90] sm:$0xff]
    %v99 = vld [vmem:[#allocation4 + $0x98] sm:$0xff]
    %v100 = vld [vmem:[#allocation4 + $0xa0] sm:$0xff]
    %v101 = vld [vmem:[#allocation4 + $0xa8] sm:$0xff]
    %v102 = vld [vmem:[#allocation4 + $0xb0] sm:$0xff]
    %v103 = vld [vmem:[#allocation4 + $0xb8] sm:$0xff]
    %v104 = vld [vmem:[#allocation4 + $0xc0] sm:$0xff]
    %v105 = vld [vmem:[#allocation4 + $0xc8] sm:$0xff]
    %v106 = vld [vmem:[#allocation4 + $0xd0] sm:$0xff]
    %v107 = vld [vmem:[#allocation4 + $0xd8] sm:$0xff]
    %v108 = vld [vmem:[#allocation4 + $0xe0] sm:$0xff]
    %v109 = vld [vmem:[#allocation4 + $0xe8] sm:$0xff]
    %v110 = vld [vmem:[#allocation4 + $0xf0] sm:$0xff]
    %v111 = vld [vmem:[#allocation4 + $0xf8] sm:$0xff]
    %v112 = vld [vmem:[#allocation4 + $0x100] sm:$0x11]
    %v113 = vld [vmem:[#allocation4 + $0x108] sm:$0x11]
    %v114 = vld [vmem:[#allocation7] ss:$8 sm:$0xf]
    %v116 = vperm.slane %v114, 0
    %v117 = vperm.slane %v114, 1
    %v118 = vperm.slane %v114, 2
    %v119 = vperm.slane %v114, 3
    %v158 = vunpack.c.l.b16 %v80
    %v159 = vunpack.c.h.b16 %v80
    %v160 = vunpack.c.l.b16 %v81
    %v161 = vunpack.c.h.b16 %v81
    %v162 = vunpack.c.l.b16 %v82
    %v163 = vunpack.c.h.b16 %v82
    %v164 = vunpack.c.l.b16 %v83
    %v165 = vunpack.c.h.b16 %v83
    %v166 = vunpack.c.l.b16 %v84
    %v167 = vunpack.c.h.b16 %v84
    %v168 = vunpack.c.l.b16 %v85
    %v169 = vunpack.c.h.b16 %v85
    %v170 = vunpack.c.l.b16 %v86
    %v171 = vunpack.c.h.b16 %v86
    %v172 = vunpack.c.l.b16 %v87
    %v173 = vunpack.c.h.b16 %v87
    %v174 = vunpack.c.l.b16 %v88
    %v175 = vunpack.c.h.b16 %v88
    %v176 = vunpack.c.l.b16 %v89
    %v177 = vunpack.c.h.b16 %v89
    %v178 = vunpack.c.l.b16 %v90
    %v179 = vunpack.c.h.b16 %v90
    %v180 = vunpack.c.l.b16 %v91
    %v181 = vunpack.c.h.b16 %v91
    %v182 = vunpack.c.l.b16 %v92
    %v183 = vunpack.c.h.b16 %v92
    %v184 = vunpack.c.l.b16 %v93
    %v185 = vunpack.c.h.b16 %v93
    %v186 = vunpack.c.l.b16 %v94
    %v187 = vunpack.c.h.b16 %v94
    %v188 = vunpack.c.l.b16 %v95
    %v189 = vunpack.c.h.b16 %v95
    %v190 = vunpack.c.l.b16 %v96
    %v191 = vunpack.c.h.b16 %v96
    %v192 = vunpack.c.l.b16 %v97
    %v193 = vunpack.c.h.b16 %v97
    %v194 = vunpack.c.l.b16 %v98
    %v195 = vunpack.c.h.b16 %v98
    %v196 = vunpack.c.l.b16 %v99
    %v197 = vunpack.c.h.b16 %v99
    %v198 = vunpack.c.l.b16 %v100
    %v199 = vunpack.c.h.b16 %v100
    %v200 = vunpack.c.l.b16 %v101
    %v201 = vunpack.c.h.b16 %v101
    %v202 = vunpack.c.l.b16 %v102
    %v203 = vunpack.c.h.b16 %v102
    %v204 = vunpack.c.l.b16 %v103
    %v205 = vunpack.c.h.b16 %v103
    %v206 = vunpack.c.l.b16 %v104
    %v207 = vunpack.c.h.b16 %v104
    %v208 = vunpack.c.l.b16 %v105
    %v209 = vunpack.c.h.b16 %v105
    %v210 = vunpack.c.l.b16 %v106
    %v211 = vunpack.c.h.b16 %v106
    %v212 = vunpack.c.l.b16 %v107
    %v213 = vunpack.c.h.b16 %v107
    %v214 = vunpack.c.l.b16 %v108
    %v215 = vunpack.c.h.b16 %v108
    %v216 = vunpack.c.l.b16 %v109
    %v217 = vunpack.c.h.b16 %v109
    %v218 = vunpack.c.l.b16 %v110
    %v219 = vunpack.c.h.b16 %v110
    %v220 = vunpack.c.l.b16 %v111
    %v221 = vunpack.c.h.b16 %v111
    %v222 = vunpack.c.l.b16 %v112
    %v223 = vunpack.c.h.b16 %v112
    %v224 = vunpack.c.l.b16 %v113
    %v225 = vunpack.c.h.b16 %v113
    %v226 = vpack.c.b16 %v162, %v158
    %v227 = vpack.c.b16 %v163, %v159
    %v228 = vpack.c.b16 %v164, %v160
    %v229 = vpack.c.b16 %v165, %v161
    %v230 = vpack.c.b16 %v170, %v166
    %v231 = vpack.c.b16 %v171, %v167
    %v232 = vpack.c.b16 %v172, %v168
    %v233 = vpack.c.b16 %v173, %v169
    %v234 = vpack.c.b16 %v178, %v174
    %v235 = vpack.c.b16 %v179, %v175
    %v236 = vpack.c.b16 %v180, %v176
    %v237 = vpack.c.b16 %v181, %v177
    %v238 = vpack.c.b16 %v186, %v182
    %v239 = vpack.c.b16 %v187, %v183
    %v240 = vpack.c.b16 %v188, %v184
    %v241 = vpack.c.b16 %v189, %v185
    %v242 = vpack.c.b16 %v194, %v190
    %v243 = vpack.c.b16 %v195, %v191
    %v244 = vpack.c.b16 %v196, %v192
    %v245 = vpack.c.b16 %v197, %v193
    %v246 = vpack.c.b16 %v202, %v198
    %v247 = vpack.c.b16 %v203, %v199
    %v248 = vpack.c.b16 %v204, %v200
    %v249 = vpack.c.b16 %v205, %v201
    %v250 = vpack.c.b16 %v210, %v206
    %v251 = vpack.c.b16 %v211, %v207
    %v252 = vpack.c.b16 %v212, %v208
    %v253 = vpack.c.b16 %v213, %v209
    %v254 = vpack.c.b16 %v218, %v214
    %v255 = vpack.c.b16 %v219, %v215
    %v256 = vpack.c.b16 %v220, %v216
    %v257 = vpack.c.b16 %v221, %v217
    %v258 = vpack.c.b16 %v222, %v222
    %v259 = vpack.c.b16 %v223, %v223
    %v260 = vpack.c.b16 %v224, %v224
    %v261 = vpack.c.b16 %v225, %v225
    %vm294 = vcmask 15360
    %v296 = vsel %vm294, %v79, 0
    %vm298 = vcmask 1040384
    %v300 = vsel %vm298, %v258, 0
    %v303 = vsel %vm298, %v259, 0
    %v306 = vsel %vm298, %v260, 0
    %v309 = vsel %vm298, %v261, 0
    %311 = vmatpush.bf16.msra.mxu0 %v254
    %312 = vmatpush.bf16.msra.mxu0 %v250
    %313 = vmatpush.bf16.msra.mxu0 %v246
    %314 = vmatpush.bf16.msra.mxu0 %v242
    %315 = vmatpush.bf16.msra.mxu0 %v238
    %316 = vmatpush.bf16.msra.mxu0 %v234
    %317 = vmatpush.bf16.msra.mxu0 %v230
    %318 = vmatpush.bf16.msra.mxu0 %v226
    %319 = vmatmul.bf16.gmra.mxu0 %v78
    %v320 = vpop.f32.mrf.mxu0
    %v321 = vadd.f32 %v116, %v320
    %v322 = vpop.f32.mrf.mxu0
    %323 = vdwg.mxu0
    %324 = vmatpush.bf16.msra.mxu0 0
    %325 = vmatpush.bf16.msra.mxu0 0
    %326 = vmatpush.bf16.msra.mxu0 0
    %327 = vmatpush.bf16.msra.mxu0 0
    %328 = vmatpush.bf16.msra.mxu0 0
    %329 = vmatpush.bf16.msra.mxu0 0
    %330 = vmatpush.bf16.msra.mxu0 0
    %331 = vmatpush.bf16.msra.mxu0 %v300
    %332 = vmatmul.bf16.gmra.mxu0 %v296
    %v333 = vpop.f32.mrf.mxu0
    %v334 = vadd.f32 %v321, %v333
    %v335 = vpop.f32.mrf.mxu0
    %336 = vdwg.mxu0
    %337 = vmatpush.bf16.msra.mxu0 %v255
    %338 = vmatpush.bf16.msra.mxu0 %v251
    %339 = vmatpush.bf16.msra.mxu0 %v247
    %340 = vmatpush.bf16.msra.mxu0 %v243
    %341 = vmatpush.bf16.msra.mxu0 %v239
    %342 = vmatpush.bf16.msra.mxu0 %v235
    %343 = vmatpush.bf16.msra.mxu0 %v231
    %344 = vmatpush.bf16.msra.mxu0 %v227
    %345 = vmatmul.bf16.gmra.mxu0 %v78
    %v346 = vpop.f32.mrf.mxu0
    %v347 = vadd.f32 %v117, %v346
    %v348 = vpop.f32.mrf.mxu0
    %349 = vdwg.mxu0
    %350 = vmatpush.bf16.msra.mxu0 0
    %351 = vmatpush.bf16.msra.mxu0 0
    %352 = vmatpush.bf16.msra.mxu0 0
    %353 = vmatpush.bf16.msra.mxu0 0
    %354 = vmatpush.bf16.msra.mxu0 0
    %355 = vmatpush.bf16.msra.mxu0 0
    %356 = vmatpush.bf16.msra.mxu0 0
    %357 = vmatpush.bf16.msra.mxu0 %v303
    %358 = vmatmul.bf16.gmra.mxu0 %v296
    %v359 = vpop.f32.mrf.mxu0
    %v360 = vadd.f32 %v347, %v359
    %v361 = vpop.f32.mrf.mxu0
    %362 = vdwg.mxu0
    %363 = vmatpush.bf16.msra.mxu0 %v256
    %364 = vmatpush.bf16.msra.mxu0 %v252
    %365 = vmatpush.bf16.msra.mxu0 %v248
    %366 = vmatpush.bf16.msra.mxu0 %v244
    %367 = vmatpush.bf16.msra.mxu0 %v240
    %368 = vmatpush.bf16.msra.mxu0 %v236
    %369 = vmatpush.bf16.msra.mxu0 %v232
    %370 = vmatpush.bf16.msra.mxu0 %v228
    %371 = vmatmul.bf16.gmra.mxu0 %v78
    %v372 = vpop.f32.mrf.mxu0
    %v373 = vadd.f32 %v118, %v372
    %v374 = vpop.f32.mrf.mxu0
    %375 = vdwg.mxu0
    %376 = vmatpush.bf16.msra.mxu0 0
    %377 = vmatpush.bf16.msra.mxu0 0
    %378 = vmatpush.bf16.msra.mxu0 0
    %379 = vmatpush.bf16.msra.mxu0 0
    %380 = vmatpush.bf16.msra.mxu0 0
    %381 = vmatpush.bf16.msra.mxu0 0
    %382 = vmatpush.bf16.msra.mxu0 0
    %383 = vmatpush.bf16.msra.mxu0 %v306
    %384 = vmatmul.bf16.gmra.mxu0 %v296
    %v385 = vpop.f32.mrf.mxu0
    %v386 = vadd.f32 %v373, %v385
    %v387 = vpop.f32.mrf.mxu0
    %388 = vdwg.mxu0
    %389 = vmatpush.bf16.msra.mxu0 %v257
    %390 = vmatpush.bf16.msra.mxu0 %v253
    %391 = vmatpush.bf16.msra.mxu0 %v249
    %392 = vmatpush.bf16.msra.mxu0 %v245
    %393 = vmatpush.bf16.msra.mxu0 %v241
    %394 = vmatpush.bf16.msra.mxu0 %v237
    %395 = vmatpush.bf16.msra.mxu0 %v233
    %396 = vmatpush.bf16.msra.mxu0 %v229
    %397 = vmatmul.bf16.gmra.mxu0 %v78
    %v398 = vpop.f32.mrf.mxu0
    %v399 = vadd.f32 %v119, %v398
    %v400 = vpop.f32.mrf.mxu0
    %401 = vdwg.mxu0
    %402 = vmatpush.bf16.msra.mxu0 0
    %403 = vmatpush.bf16.msra.mxu0 0
    %404 = vmatpush.bf16.msra.mxu0 0
    %405 = vmatpush.bf16.msra.mxu0 0
    %406 = vmatpush.bf16.msra.mxu0 0
    %407 = vmatpush.bf16.msra.mxu0 0
    %408 = vmatpush.bf16.msra.mxu0 0
    %409 = vmatpush.bf16.msra.mxu0 %v309
    %410 = vmatmul.bf16.gmra.mxu0 %v296
    %v411 = vpop.f32.mrf.mxu0
    %v412 = vadd.f32 %v399, %v411
    %v413 = vpop.f32.mrf.mxu0
    %414 = vdwg.mxu0
    %v415 = vmax.f32 %v334, 0.0
    %v416 = vmax.f32 %v360, 0.0
    %v417 = vmax.f32 %v386, 0.0
    %v418 = vmax.f32 %v412, 0.0
    %v420 = vrot.slane %v415, 6
    %421 = vrot.lane.b32.xlu0 %v420, 64
    %v422 = vpop.permute.xlu0 %421
    %v425 = vrot.slane %v416, 4
    %v427 = vrot.slane %v416, 2
    %428 = vrot.lane.b32.xlu0 %v427, 64
    %v429 = vpop.permute.xlu0 %428
    %v432 = vrot.slane %v417, 6
    %433 = vrot.lane.b32.xlu0 %v432, 64
    %v434 = vpop.permute.xlu0 %433
    %v437 = vrot.slane %v418, 4
    %v439 = vrot.slane %v418, 2
    %440 = vrot.lane.b32.xlu0 %v439, 64
    %v441 = vpop.permute.xlu0 %440
    %vm443 = vcmask 1041408
    %v444 = vsel %vm443, %v415, %v422
    %vm445 = vcmask 1043456
    %v446 = vsel %vm445, %v444, %v425
    %vm447 = vcmask 1045504
    %v448 = vsel %vm447, %v446, %v429
    %v449 = vsel %vm443, %v417, %v434
    %v450 = vsel %vm445, %v449, %v437
    %v451 = vsel %vm447, %v450, %v441
    %v452 = vpack.c.bf16 %v448, %v448
    %v453 = vpack.c.bf16 %v451, %v451
    %v456 = vunpack.c.l.b16 %v452
    %v457 = vunpack.c.l.b16 %v453
    %v458 = vpack.c.b16 %v457, %v456
    %v459 = vrot.slane %v458, 7
    %v462 = vsel %vm298, 0, %v459
    %v463 = vrot.slane %v458, 1
    %vm464 = vcmask 1046528
    %v466 = vsel %vm464, %v463, 0
    %467 = vrot.lane.b32.xlu0 %v458, 64
    %v468 = vpop.permute.xlu0 %467
    %vm469 = vcmask 523264
    %v471 = vsel %vm469, %v462, %v468
    %v473 = vld [vmem:[%s2] sm:$0xf]
    %v474 = vld [vmem:[%s2 + $0x4] sm:$0xf]
    %v475 = vld [vmem:[%s2 + $0x8] sm:$0xf]
    %v476 = vld [vmem:[%s2 + $0xc] sm:$0xf]
    %v477 = vld [vmem:[%s2 + $0x10] sm:$0xf]
    %v478 = vld [vmem:[%s2 + $0x14] sm:$0xf]
    %v479 = vld [vmem:[%s2 + $0x18] sm:$0xf]
    %v480 = vld [vmem:[%s2 + $0x1c] sm:$0xf]
    %v481 = vld [vmem:[%s2 + $0x20] sm:$0xf]
    %v482 = vld [vmem:[%s2 + $0x24] sm:$0xf]
    %v483 = vld [vmem:[%s2 + $0x28] sm:$0xf]
    %v484 = vld [vmem:[%s2 + $0x2c] sm:$0xf]
    %v485 = vld [vmem:[%s2 + $0x30] sm:$0xf]
    %v486 = vld [vmem:[%s2 + $0x34] sm:$0xf]
    %v487 = vld [vmem:[%s2 + $0x38] sm:$0xf]
    %v488 = vld [vmem:[%s2 + $0x3c] sm:$0xf]
    %v489 = vld [vmem:[%s2 + $0x40] sm:$0xf]
    %v490 = vld [vmem:[%s2 + $0x44] sm:$0xf]
    %v491 = vld [vmem:[%s2 + $0x48] sm:$0xf]
    %v492 = vld [vmem:[%s2 + $0x4c] sm:$0xf]
    %v493 = vld [vmem:[%s2 + $0x50] sm:$0xf]
    %v494 = vld [vmem:[%s2 + $0x54] sm:$0xf]
    %v495 = vld [vmem:[%s2 + $0x58] sm:$0xf]
    %v496 = vld [vmem:[%s2 + $0x5c] sm:$0xf]
    %v497 = vld [vmem:[#allocation7 + $0x1] ss:$0 sm:$0xff]
    %v522 = vunpack.c.l.b16 %v473
    %v523 = vunpack.c.l.b16 %v474
    %v524 = vunpack.c.l.b16 %v475
    %v525 = vunpack.c.l.b16 %v476
    %v526 = vunpack.c.l.b16 %v477
    %v527 = vunpack.c.l.b16 %v478
    %v528 = vunpack.c.l.b16 %v479
    %v529 = vunpack.c.l.b16 %v480
    %v530 = vunpack.c.l.b16 %v481
    %v531 = vunpack.c.l.b16 %v482
    %v532 = vunpack.c.l.b16 %v483
    %v533 = vunpack.c.l.b16 %v484
    %v534 = vunpack.c.l.b16 %v485
    %v535 = vunpack.c.l.b16 %v486
    %v536 = vunpack.c.l.b16 %v487
    %v537 = vunpack.c.l.b16 %v488
    %v538 = vunpack.c.l.b16 %v489
    %v539 = vunpack.c.l.b16 %v490
    %v540 = vunpack.c.l.b16 %v491
    %v541 = vunpack.c.l.b16 %v492
    %v542 = vunpack.c.l.b16 %v493
    %v543 = vunpack.c.l.b16 %v494
    %v544 = vunpack.c.l.b16 %v495
    %v545 = vunpack.c.l.b16 %v496
    %v546 = vpack.c.b16 %v523, %v522
    %v547 = vpack.c.b16 %v525, %v524
    %v548 = vpack.c.b16 %v527, %v526
    %v549 = vpack.c.b16 %v529, %v528
    %v550 = vpack.c.b16 %v531, %v530
    %v551 = vpack.c.b16 %v533, %v532
    %v552 = vpack.c.b16 %v535, %v534
    %v553 = vpack.c.b16 %v537, %v536
    %v554 = vpack.c.b16 %v539, %v538
    %v555 = vpack.c.b16 %v541, %v540
    %v556 = vpack.c.b16 %v543, %v542
    %v557 = vpack.c.b16 %v545, %v544
    %v570 = vsel %vm469, %v466, 0
    %572 = vmatpush.bf16.msra.mxu0 %v553
    %573 = vmatpush.bf16.msra.mxu0 %v552
    %574 = vmatpush.bf16.msra.mxu0 %v551
    %575 = vmatpush.bf16.msra.mxu0 %v550
    %576 = vmatpush.bf16.msra.mxu0 %v549
    %577 = vmatpush.bf16.msra.mxu0 %v548
    %578 = vmatpush.bf16.msra.mxu0 %v547
    %579 = vmatpush.bf16.msra.mxu0 %v546
    %580 = vmatmul.bf16.gmra.mxu0 %v471
    %v581 = vpop.f32.mrf.mxu0
    %v582 = vadd.f32 %v497, %v581
    %v583 = vpop.f32.mrf.mxu0
    %v584 = vadd.f32 %v497, %v583
    %585 = vdwg.mxu0
    %586 = vmatpush.bf16.msra.mxu0 0
    %587 = vmatpush.bf16.msra.mxu0 0
    %588 = vmatpush.bf16.msra.mxu0 0
    %589 = vmatpush.bf16.msra.mxu0 0
    %590 = vmatpush.bf16.msra.mxu0 %v557
    %591 = vmatpush.bf16.msra.mxu0 %v556
    %592 = vmatpush.bf16.msra.mxu0 %v555
    %593 = vmatpush.bf16.msra.mxu0 %v554
    %594 = vmatmul.bf16.gmra.mxu0 %v570
    %v595 = vpop.f32.mrf.mxu0
    %v596 = vadd.f32 %v582, %v595
    %v597 = vpop.f32.mrf.mxu0
    %v598 = vadd.f32 %v584, %v597
    %599 = vdwg.mxu0
    %v600 = vmax.f32 %v596, 0.0
    %v601 = vmax.f32 %v598, 0.0
    %v602 = vpack.c.bf16 %v600, %v600
    %v603 = vpack.c.bf16 %v601, %v601
    %v606 = vunpack.c.l.b16 %v602
    %v607 = vunpack.c.l.b16 %v603
    %v608 = vpack.c.b16 %v607, %v606
    %v609 = vrot.slane %v608, 7
    %v611 = vsel %vm298, 0, %v609
    %v612 = vrot.slane %v608, 1
    %v614 = vsel %vm464, %v612, 0
    %615 = vrot.lane.b32.xlu0 %v608, 64
    %v616 = vpop.permute.xlu0 %615
    %v618 = vsel %vm469, %v611, %v616
    %v620 = vld [vmem:[%s2 + $0x60] sm:$0xf]
    %v621 = vld [vmem:[%s2 + $0x64] sm:$0xf]
    %v622 = vld [vmem:[%s2 + $0x68] sm:$0xf]
    %v623 = vld [vmem:[%s2 + $0x6c] sm:$0xf]
    %v624 = vld [vmem:[%s2 + $0x70] sm:$0xf]
    %v625 = vld [vmem:[%s2 + $0x74] sm:$0xf]
    %v626 = vld [vmem:[%s2 + $0x78] sm:$0xf]
    %v627 = vld [vmem:[%s2 + $0x7c] sm:$0xf]
    %v628 = vld [vmem:[%s2 + $0x80] sm:$0xf]
    %v629 = vld [vmem:[%s2 + $0x84] sm:$0xf]
    %v630 = vld [vmem:[%s2 + $0x88] sm:$0xf]
    %v631 = vld [vmem:[%s2 + $0x8c] sm:$0xf]
    %v632 = vld [vmem:[%s2 + $0x90] sm:$0xf]
    %v633 = vld [vmem:[%s2 + $0x94] sm:$0xf]
    %v634 = vld [vmem:[%s2 + $0x98] sm:$0xf]
    %v635 = vld [vmem:[%s2 + $0x9c] sm:$0xf]
    %v636 = vld [vmem:[%s2 + $0xa0] sm:$0xf]
    %v637 = vld [vmem:[%s2 + $0xa4] sm:$0xf]
    %v638 = vld [vmem:[%s2 + $0xa8] sm:$0xf]
    %v639 = vld [vmem:[%s2 + $0xac] sm:$0xf]
    %v640 = vld [vmem:[%s2 + $0xb0] sm:$0xf]
    %v641 = vld [vmem:[%s2 + $0xb4] sm:$0xf]
    %v642 = vld [vmem:[%s2 + $0xb8] sm:$0xf]
    %v643 = vld [vmem:[%s2 + $0xbc] sm:$0xf]
    %v644 = vld [vmem:[#allocation7 + $0x2] ss:$0 sm:$0xff]
    %v669 = vunpack.c.l.b16 %v620
    %v670 = vunpack.c.l.b16 %v621
    %v671 = vunpack.c.l.b16 %v622
    %v672 = vunpack.c.l.b16 %v623
    %v673 = vunpack.c.l.b16 %v624
    %v674 = vunpack.c.l.b16 %v625
    %v675 = vunpack.c.l.b16 %v626
    %v676 = vunpack.c.l.b16 %v627
    %v677 = vunpack.c.l.b16 %v628
    %v678 = vunpack.c.l.b16 %v629
    %v679 = vunpack.c.l.b16 %v630
    %v680 = vunpack.c.l.b16 %v631
    %v681 = vunpack.c.l.b16 %v632
    %v682 = vunpack.c.l.b16 %v633
    %v683 = vunpack.c.l.b16 %v634
    %v684 = vunpack.c.l.b16 %v635
    %v685 = vunpack.c.l.b16 %v636
    %v686 = vunpack.c.l.b16 %v637
    %v687 = vunpack.c.l.b16 %v638
    %v688 = vunpack.c.l.b16 %v639
    %v689 = vunpack.c.l.b16 %v640
    %v690 = vunpack.c.l.b16 %v641
    %v691 = vunpack.c.l.b16 %v642
    %v692 = vunpack.c.l.b16 %v643
    %v693 = vpack.c.b16 %v670, %v669
    %v694 = vpack.c.b16 %v672, %v671
    %v695 = vpack.c.b16 %v674, %v673
    %v696 = vpack.c.b16 %v676, %v675
    %v697 = vpack.c.b16 %v678, %v677
    %v698 = vpack.c.b16 %v680, %v679
    %v699 = vpack.c.b16 %v682, %v681
    %v700 = vpack.c.b16 %v684, %v683
    %v701 = vpack.c.b16 %v686, %v685
    %v702 = vpack.c.b16 %v688, %v687
    %v703 = vpack.c.b16 %v690, %v689
    %v704 = vpack.c.b16 %v692, %v691
    %v717 = vsel %vm469, %v614, 0
    %719 = vmatpush.bf16.msra.mxu0 %v700
    %720 = vmatpush.bf16.msra.mxu0 %v699
    %721 = vmatpush.bf16.msra.mxu0 %v698
    %722 = vmatpush.bf16.msra.mxu0 %v697
    %723 = vmatpush.bf16.msra.mxu0 %v696
    %724 = vmatpush.bf16.msra.mxu0 %v695
    %725 = vmatpush.bf16.msra.mxu0 %v694
    %726 = vmatpush.bf16.msra.mxu0 %v693
    %727 = vmatmul.bf16.gmra.mxu0 %v618
    %v728 = vpop.f32.mrf.mxu0
    %v729 = vadd.f32 %v644, %v728
    %v730 = vpop.f32.mrf.mxu0
    %v731 = vadd.f32 %v644, %v730
    %732 = vdwg.mxu0
    %733 = vmatpush.bf16.msra.mxu0 0
    %734 = vmatpush.bf16.msra.mxu0 0
    %735 = vmatpush.bf16.msra.mxu0 0
    %736 = vmatpush.bf16.msra.mxu0 0
    %737 = vmatpush.bf16.msra.mxu0 %v704
    %738 = vmatpush.bf16.msra.mxu0 %v703
    %739 = vmatpush.bf16.msra.mxu0 %v702
    %740 = vmatpush.bf16.msra.mxu0 %v701
    %741 = vmatmul.bf16.gmra.mxu0 %v717
    %v742 = vpop.f32.mrf.mxu0
    %v743 = vadd.f32 %v729, %v742
    %v744 = vpop.f32.mrf.mxu0
    %v745 = vadd.f32 %v731, %v744
    %746 = vdwg.mxu0
    %v747 = vadd.f32 %v743, %v448
    %v748 = vadd.f32 %v745, %v451
    %v749 = vmax.f32 %v747, 0.0
    %v750 = vmax.f32 %v748, 0.0
    %v751 = vpack.c.bf16 %v749, %v749
    %v752 = vpack.c.bf16 %v750, %v750
    %v755 = vunpack.c.l.b16 %v751
    %v756 = vunpack.c.l.b16 %v752
    %v757 = vpack.c.b16 %v756, %v755
    %v758 = vrot.slane %v757, 7
    %v760 = vsel %vm298, 0, %v758
    %v761 = vrot.slane %v757, 1
    %v763 = vsel %vm464, %v761, 0
    %764 = vrot.lane.b32.xlu0 %v757, 64
    %v765 = vpop.permute.xlu0 %764
    %v767 = vsel %vm469, %v760, %v765
    %v770 = vrot.slane %v767, 1
    %v771 = vrot.slane %v763, 1
    %v772 = vrot.slane %v767, 2
    %v773 = vrot.slane %v763, 2
    %v774 = vrot.slane %v767, 3
    %v775 = vrot.slane %v763, 3
    %v777 = vsel %vm298, %v767, %v770
    %v779 = vsel %vm298, %v763, %v771
    %v781 = vsel %vm443, %v777, %v772
    %v783 = vsel %vm443, %v779, %v773
    %vm784 = vcmask 1042432
    %v786 = vsel %vm784, %v781, %v774
    %v789 = vsel %vm784, %v783, %v775
    %v790 = vld [vmem:[%s3] sm:$0xf]
    %v791 = vld [vmem:[%s3 + $0x4] sm:$0xf]
    %v792 = vld [vmem:[%s3 + $0x8] sm:$0xf]
    %v793 = vld [vmem:[%s3 + $0xc] sm:$0xf]
    %v794 = vld [vmem:[%s3 + $0x10] sm:$0xf]
    %v795 = vld [vmem:[%s3 + $0x14] sm:$0xf]
    %v796 = vld [vmem:[%s3 + $0x18] sm:$0xf]
    %v797 = vld [vmem:[%s3 + $0x1c] sm:$0xf]
    %v798 = vld [vmem:[%s3 + $0x20] sm:$0xf]
    %v799 = vld [vmem:[%s3 + $0x24] sm:$0xf]
    %v800 = vld [vmem:[%s3 + $0x28] sm:$0xf]
    %v801 = vld [vmem:[%s3 + $0x2c] sm:$0xf]
    %v802 = vld [vmem:[%s3 + $0x30] sm:$0xf]
    %v803 = vld [vmem:[%s3 + $0x34] sm:$0xf]
    %v804 = vld [vmem:[%s3 + $0x38] sm:$0xf]
    %v805 = vld [vmem:[%s3 + $0x3c] sm:$0xf]
    %v806 = vld [vmem:[%s3 + $0x40] sm:$0xf]
    %v807 = vld [vmem:[%s3 + $0x44] sm:$0xf]
    %v808 = vld [vmem:[%s3 + $0x48] sm:$0xf]
    %v809 = vld [vmem:[%s3 + $0x4c] sm:$0xf]
    %v810 = vld [vmem:[%s3 + $0x50] sm:$0xf]
    %v811 = vld [vmem:[%s3 + $0x54] sm:$0xf]
    %v812 = vld [vmem:[%s3 + $0x58] sm:$0xf]
    %v813 = vld [vmem:[%s3 + $0x5c] sm:$0xf]
    %v814 = vld [vmem:[#allocation7 + $0x3] ss:$0 sm:$0xff]
    %v839 = vunpack.c.l.b16 %v790
    %v840 = vunpack.c.l.b16 %v791
    %v841 = vunpack.c.l.b16 %v792
    %v842 = vunpack.c.l.b16 %v793
    %v843 = vunpack.c.l.b16 %v794
    %v844 = vunpack.c.l.b16 %v795
    %v845 = vunpack.c.l.b16 %v796
    %v846 = vunpack.c.l.b16 %v797
    %v847 = vunpack.c.l.b16 %v798
    %v848 = vunpack.c.l.b16 %v799
    %v849 = vunpack.c.l.b16 %v800
    %v850 = vunpack.c.l.b16 %v801
    %v851 = vunpack.c.l.b16 %v802
    %v852 = vunpack.c.l.b16 %v803
    %v853 = vunpack.c.l.b16 %v804
    %v854 = vunpack.c.l.b16 %v805
    %v855 = vunpack.c.l.b16 %v806
    %v856 = vunpack.c.l.b16 %v807
    %v857 = vunpack.c.l.b16 %v808
    %v858 = vunpack.c.l.b16 %v809
    %v859 = vunpack.c.l.b16 %v810
    %v860 = vunpack.c.l.b16 %v811
    %v861 = vunpack.c.l.b16 %v812
    %v862 = vunpack.c.l.b16 %v813
    %v863 = vpack.c.b16 %v840, %v839
    %v864 = vpack.c.b16 %v842, %v841
    %v865 = vpack.c.b16 %v844, %v843
    %v866 = vpack.c.b16 %v846, %v845
    %v867 = vpack.c.b16 %v848, %v847
    %v868 = vpack.c.b16 %v850, %v849
    %v869 = vpack.c.b16 %v852, %v851
    %v870 = vpack.c.b16 %v854, %v853
    %v871 = vpack.c.b16 %v856, %v855
    %v872 = vpack.c.b16 %v858, %v857
    %v873 = vpack.c.b16 %v860, %v859
    %v874 = vpack.c.b16 %v862, %v861
    %v887 = vsel %vm469, %v789, 0
    %889 = vmatpush.bf16.msra.mxu0 %v870
    %890 = vmatpush.bf16.msra.mxu0 %v869
    %891 = vmatpush.bf16.msra.mxu0 %v868
    %892 = vmatpush.bf16.msra.mxu0 %v867
    %893 = vmatpush.bf16.msra.mxu0 %v866
    %894 = vmatpush.bf16.msra.mxu0 %v865
    %895 = vmatpush.bf16.msra.mxu0 %v864
    %896 = vmatpush.bf16.msra.mxu0 %v863
    %897 = vmatmul.bf16.gmra.mxu0 %v786
    %v898 = vpop.f32.mrf.mxu0
    %v899 = vadd.f32 %v814, %v898
    %v900 = vpop.f32.mrf.mxu0
    %901 = vdwg.mxu0
    %902 = vmatpush.bf16.msra.mxu0 0
    %903 = vmatpush.bf16.msra.mxu0 0
    %904 = vmatpush.bf16.msra.mxu0 0
    %905 = vmatpush.bf16.msra.mxu0 0
    %906 = vmatpush.bf16.msra.mxu0 %v874
    %907 = vmatpush.bf16.msra.mxu0 %v873
    %908 = vmatpush.bf16.msra.mxu0 %v872
    %909 = vmatpush.bf16.msra.mxu0 %v871
    %910 = vmatmul.bf16.gmra.mxu0 %v887
    %v911 = vpop.f32.mrf.mxu0
    %v912 = vadd.f32 %v899, %v911
    %v913 = vpop.f32.mrf.mxu0
    %914 = vdwg.mxu0
    %v915 = vmax.f32 %v912, 0.0
    %v916 = vpack.c.bf16 %v915, %v915
    %v918 = vunpack.c.l.b16 %v916
    %v919 = vpack.c.b16 %v918, %v918
    %v920 = vrot.slane %v919, 7
    %v922 = vsel %vm298, 0, %v920
    %v924 = vrot.slane %v919, 1
    %v926 = vsel %vm784, %v924, 0
    %v928 = vld [vmem:[%s3 + $0x60] sm:$0xf]
    %v929 = vld [vmem:[%s3 + $0x64] sm:$0xf]
    %v930 = vld [vmem:[%s3 + $0x68] sm:$0xf]
    %v931 = vld [vmem:[%s3 + $0x6c] sm:$0xf]
    %v932 = vld [vmem:[%s3 + $0x70] sm:$0xf]
    %v933 = vld [vmem:[%s3 + $0x74] sm:$0xf]
    %v934 = vld [vmem:[%s3 + $0x78] sm:$0xf]
    %v935 = vld [vmem:[%s3 + $0x7c] sm:$0xf]
    %v936 = vld [vmem:[%s3 + $0x80] sm:$0xf]
    %v937 = vld [vmem:[%s3 + $0x84] sm:$0xf]
    %v938 = vld [vmem:[%s3 + $0x88] sm:$0xf]
    %v939 = vld [vmem:[%s3 + $0x8c] sm:$0xf]
    %v940 = vld [vmem:[%s3 + $0x90] sm:$0xf]
    %v941 = vld [vmem:[%s3 + $0x94] sm:$0xf]
    %v942 = vld [vmem:[%s3 + $0x98] sm:$0xf]
    %v943 = vld [vmem:[%s3 + $0x9c] sm:$0xf]
    %v944 = vld [vmem:[%s3 + $0xa0] sm:$0xf]
    %v945 = vld [vmem:[%s3 + $0xa4] sm:$0xf]
    %v946 = vld [vmem:[%s3 + $0xa8] sm:$0xf]
    %v947 = vld [vmem:[%s3 + $0xac] sm:$0xf]
    %v948 = vld [vmem:[%s3 + $0xb0] sm:$0xf]
    %v949 = vld [vmem:[%s3 + $0xb4] sm:$0xf]
    %v950 = vld [vmem:[%s3 + $0xb8] sm:$0xf]
    %v951 = vld [vmem:[%s3 + $0xbc] sm:$0xf]
    %v952 = vld [vmem:[%s3 + $0xc0] sm:$0xf]
    %v953 = vld [vmem:[%s3 + $0xc4] sm:$0xf]
    %v954 = vld [vmem:[%s3 + $0xc8] sm:$0xf]
    %v955 = vld [vmem:[%s3 + $0xcc] sm:$0xf]
    %v956 = vld [vmem:[%s3 + $0xd0] sm:$0xf]
    %v957 = vld [vmem:[%s3 + $0xd4] sm:$0xf]
    %v958 = vld [vmem:[%s3 + $0xd8] sm:$0xf]
    %v959 = vld [vmem:[%s3 + $0xdc] sm:$0xf]
    %v960 = vld [vmem:[%s3 + $0xe0] sm:$0xf]
    %v961 = vld [vmem:[%s3 + $0xe4] sm:$0xf]
    %v962 = vld [vmem:[%s3 + $0xe8] sm:$0xf]
    %v963 = vld [vmem:[%s3 + $0xec] sm:$0xf]
    %v964 = vld [vmem:[%s3 + $0xf0] sm:$0xf]
    %v965 = vld [vmem:[%s3 + $0xf4] sm:$0xf]
    %v966 = vld [vmem:[%s3 + $0xf8] sm:$0xf]
    %v967 = vld [vmem:[%s3 + $0xfc] sm:$0xf]
    %v968 = vld [vmem:[%s3 + $0x100] sm:$0xf]
    %v969 = vld [vmem:[%s3 + $0x104] sm:$0xf]
    %v970 = vld [vmem:[%s3 + $0x108] sm:$0xf]
    %v971 = vld [vmem:[%s3 + $0x10c] sm:$0xf]
    %v972 = vld [vmem:[%s3 + $0x110] sm:$0xf]
    %v973 = vld [vmem:[%s3 + $0x114] sm:$0xf]
    %v974 = vld [vmem:[%s3 + $0x118] sm:$0xf]
    %v975 = vld [vmem:[%s3 + $0x11c] sm:$0xf]
    %v976 = vld [vmem:[#allocation7 + $0x4] ss:$0 sm:$0xff]
    %v1025 = vunpack.c.l.b16 %v928
    %v1026 = vunpack.c.l.b16 %v929
    %v1027 = vunpack.c.l.b16 %v930
    %v1028 = vunpack.c.l.b16 %v931
    %v1029 = vunpack.c.l.b16 %v932
    %v1030 = vunpack.c.l.b16 %v933
    %v1031 = vunpack.c.l.b16 %v934
    %v1032 = vunpack.c.l.b16 %v935
    %v1033 = vunpack.c.l.b16 %v936
    %v1034 = vunpack.c.l.b16 %v937
    %v1035 = vunpack.c.l.b16 %v938
    %v1036 = vunpack.c.l.b16 %v939
    %v1037 = vunpack.c.l.b16 %v940
    %v1038 = vunpack.c.l.b16 %v941
    %v1039 = vunpack.c.l.b16 %v942
    %v1040 = vunpack.c.l.b16 %v943
    %v1041 = vunpack.c.l.b16 %v944
    %v1042 = vunpack.c.l.b16 %v945
    %v1043 = vunpack.c.l.b16 %v946
    %v1044 = vunpack.c.l.b16 %v947
    %v1045 = vunpack.c.l.b16 %v948
    %v1046 = vunpack.c.l.b16 %v949
    %v1047 = vunpack.c.l.b16 %v950
    %v1048 = vunpack.c.l.b16 %v951
    %v1049 = vunpack.c.l.b16 %v952
    %v1050 = vunpack.c.l.b16 %v953
    %v1051 = vunpack.c.l.b16 %v954
    %v1052 = vunpack.c.l.b16 %v955
    %v1053 = vunpack.c.l.b16 %v956
    %v1054 = vunpack.c.l.b16 %v957
    %v1055 = vunpack.c.l.b16 %v958
    %v1056 = vunpack.c.l.b16 %v959
    %v1057 = vunpack.c.l.b16 %v960
    %v1058 = vunpack.c.l.b16 %v961
    %v1059 = vunpack.c.l.b16 %v962
    %v1060 = vunpack.c.l.b16 %v963
    %v1061 = vunpack.c.l.b16 %v964
    %v1062 = vunpack.c.l.b16 %v965
    %v1063 = vunpack.c.l.b16 %v966
    %v1064 = vunpack.c.l.b16 %v967
    %v1065 = vunpack.c.l.b16 %v968
    %v1066 = vunpack.c.l.b16 %v969
    %v1067 = vunpack.c.l.b16 %v970
    %v1068 = vunpack.c.l.b16 %v971
    %v1069 = vunpack.c.l.b16 %v972
    %v1070 = vunpack.c.l.b16 %v973
    %v1071 = vunpack.c.l.b16 %v974
    %v1072 = vunpack.c.l.b16 %v975
    %v1073 = vpack.c.b16 %v1026, %v1025
    %v1074 = vpack.c.b16 %v1028, %v1027
    %v1075 = vpack.c.b16 %v1030, %v1029
    %v1076 = vpack.c.b16 %v1032, %v1031
    %v1077 = vpack.c.b16 %v1034, %v1033
    %v1078 = vpack.c.b16 %v1036, %v1035
    %v1079 = vpack.c.b16 %v1038, %v1037
    %v1080 = vpack.c.b16 %v1040, %v1039
    %v1081 = vpack.c.b16 %v1042, %v1041
    %v1082 = vpack.c.b16 %v1044, %v1043
    %v1083 = vpack.c.b16 %v1046, %v1045
    %v1084 = vpack.c.b16 %v1048, %v1047
    %v1085 = vpack.c.b16 %v1050, %v1049
    %v1086 = vpack.c.b16 %v1052, %v1051
    %v1087 = vpack.c.b16 %v1054, %v1053
    %v1088 = vpack.c.b16 %v1056, %v1055
    %v1089 = vpack.c.b16 %v1058, %v1057
    %v1090 = vpack.c.b16 %v1060, %v1059
    %v1091 = vpack.c.b16 %v1062, %v1061
    %v1092 = vpack.c.b16 %v1064, %v1063
    %v1093 = vpack.c.b16 %v1066, %v1065
    %v1094 = vpack.c.b16 %v1068, %v1067
    %v1095 = vpack.c.b16 %v1070, %v1069
    %v1096 = vpack.c.b16 %v1072, %v1071
    %1121 = vmatpush.bf16.msra.mxu0 %v1080
    %1122 = vmatpush.bf16.msra.mxu0 %v1079
    %1123 = vmatpush.bf16.msra.mxu0 %v1078
    %1124 = vmatpush.bf16.msra.mxu0 %v1077
    %1125 = vmatpush.bf16.msra.mxu0 %v1076
    %1126 = vmatpush.bf16.msra.mxu0 %v1075
    %1127 = vmatpush.bf16.msra.mxu0 %v1074
    %1128 = vmatpush.bf16.msra.mxu0 %v1073
    %1129 = vmatmul.bf16.gmra.mxu0 %v922
    %v1130 = vpop.f32.mrf.mxu0
    %v1131 = vadd.f32 %v976, %v1130
    %v1132 = vpop.f32.mrf.mxu0
    %1133 = vdwg.mxu0
    %1134 = vmatpush.bf16.msra.mxu0 %v1088
    %1135 = vmatpush.bf16.msra.mxu0 %v1087
    %1136 = vmatpush.bf16.msra.mxu0 %v1086
    %1137 = vmatpush.bf16.msra.mxu0 %v1085
    %1138 = vmatpush.bf16.msra.mxu0 %v1084
    %1139 = vmatpush.bf16.msra.mxu0 %v1083
    %1140 = vmatpush.bf16.msra.mxu0 %v1082
    %1141 = vmatpush.bf16.msra.mxu0 %v1081
    %1142 = vmatmul.bf16.gmra.mxu0 %v916
    %v1143 = vpop.f32.mrf.mxu0
    %v1144 = vadd.f32 %v1131, %v1143
    %v1145 = vpop.f32.mrf.mxu0
    %1146 = vdwg.mxu0
    %1147 = vmatpush.bf16.msra.mxu0 %v1096
    %1148 = vmatpush.bf16.msra.mxu0 %v1095
    %1149 = vmatpush.bf16.msra.mxu0 %v1094
    %1150 = vmatpush.bf16.msra.mxu0 %v1093
    %1151 = vmatpush.bf16.msra.mxu0 %v1092
    %1152 = vmatpush.bf16.msra.mxu0 %v1091
    %1153 = vmatpush.bf16.msra.mxu0 %v1090
    %1154 = vmatpush.bf16.msra.mxu0 %v1089
    %1155 = vmatmul.bf16.gmra.mxu0 %v926
    %v1156 = vpop.f32.mrf.mxu0
    %v1157 = vadd.f32 %v1144, %v1156
    %v1158 = vpop.f32.mrf.mxu0
    %1159 = vdwg.mxu0
    %v1160 = vld [vmem:[%s3 + $0x120] sm:$0xf]
    %v1161 = vld [vmem:[%s3 + $0x124] sm:$0xf]
    %v1162 = vld [vmem:[%s3 + $0x128] sm:$0xf]
    %v1163 = vld [vmem:[%s3 + $0x12c] sm:$0xf]
    %v1164 = vld [vmem:[%s3 + $0x130] sm:$0xf]
    %v1165 = vld [vmem:[%s3 + $0x134] sm:$0xf]
    %v1166 = vld [vmem:[%s3 + $0x138] sm:$0xf]
    %v1167 = vld [vmem:[%s3 + $0x13c] sm:$0xf]
    %v1168 = vld [vmem:[#allocation7 + $0x5] ss:$0 sm:$0xff]
    %1170 = vrot.lane.b32.xlu0 %v786, 64
    %v1171 = vpop.permute.xlu0 %1170
    %v1180 = vunpack.c.l.b16 %v1160
    %v1181 = vunpack.c.l.b16 %v1161
    %v1182 = vunpack.c.l.b16 %v1162
    %v1183 = vunpack.c.l.b16 %v1163
    %v1184 = vunpack.c.l.b16 %v1164
    %v1185 = vunpack.c.l.b16 %v1165
    %v1186 = vunpack.c.l.b16 %v1166
    %v1187 = vunpack.c.l.b16 %v1167
    %v1188 = vpack.c.b16 %v1181, %v1180
    %v1189 = vpack.c.b16 %v1183, %v1182
    %v1190 = vpack.c.b16 %v1185, %v1184
    %v1191 = vpack.c.b16 %v1187, %v1186
    %v1197 = vsel %vm469, %v1171, 0
    %1199 = vmatpush.bf16.msra.mxu0 0
    %1200 = vmatpush.bf16.msra.mxu0 0
    %1201 = vmatpush.bf16.msra.mxu0 0
    %1202 = vmatpush.bf16.msra.mxu0 0
    %1203 = vmatpush.bf16.msra.mxu0 %v1191
    %1204 = vmatpush.bf16.msra.mxu0 %v1190
    %1205 = vmatpush.bf16.msra.mxu0 %v1189
    %1206 = vmatpush.bf16.msra.mxu0 %v1188
    %1207 = vmatmul.bf16.gmra.mxu0 %v1197
    %v1208 = vpop.f32.mrf.mxu0
    %v1209 = vadd.f32 %v1168, %v1208
    %v1210 = vpop.f32.mrf.mxu0
    %1211 = vdwg.mxu0
    %v1212 = vadd.f32 %v1157, %v1209
    %v1213 = vmax.f32 %v1212, 0.0
    %v1214 = vpack.c.bf16 %v1213, %v1213
    %v1216 = vunpack.c.l.b16 %v1214
    %v1217 = vpack.c.b16 %v1216, %v1216
    %v1218 = vrot.slane %v1217, 7
    %v1220 = vsel %vm298, 0, %v1218
    %v1221 = vrot.slane %v1217, 1
    %v1223 = vsel %vm784, %v1221, 0
    %v1226 = vrot.slane %v1220, 1
    %v1227 = vrot.slane %v1214, 1
    %v1228 = vrot.slane %v1223, 1
    %v1230 = vsel %vm298, %v1220, %v1226
    %v1234 = vsel %vm298, %v1214, %v1227
    %v1237 = vsel %vm298, %v1223, %v1228
    %s1239 = smul.u32 4, 192
    %s1240 = smul.u32 %s1239, 2
    %s1241 = sshll.u32 %s1240, 4
    %1242 = dma.done [#allocation3], %s1241
    %v1243 = vld [vmem:[#allocation2] sm:$0xff]
    %v1244 = vld [vmem:[#allocation2 + $0x8] sm:$0xff]
    %v1245 = vld [vmem:[#allocation2 + $0x10] sm:$0xff]
    %v1246 = vld [vmem:[#allocation2 + $0x18] sm:$0xff]
    %v1247 = vld [vmem:[#allocation2 + $0x20] sm:$0xff]
    %v1248 = vld [vmem:[#allocation2 + $0x28] sm:$0xff]
    %v1249 = vld [vmem:[#allocation2 + $0x30] sm:$0xff]
    %v1250 = vld [vmem:[#allocation2 + $0x38] sm:$0xff]
    %v1251 = vld [vmem:[#allocation2 + $0x40] sm:$0xff]
    %v1252 = vld [vmem:[#allocation2 + $0x48] sm:$0xff]
    %v1253 = vld [vmem:[#allocation2 + $0x50] sm:$0xff]
    %v1254 = vld [vmem:[#allocation2 + $0x58] sm:$0xff]
    %v1255 = vld [vmem:[#allocation2 + $0x60] sm:$0xff]
    %v1256 = vld [vmem:[#allocation2 + $0x68] sm:$0xff]
    %v1257 = vld [vmem:[#allocation2 + $0x70] sm:$0xff]
    %v1258 = vld [vmem:[#allocation2 + $0x78] sm:$0xff]
    %v1259 = vld [vmem:[#allocation2 + $0x80] sm:$0xff]
    %v1260 = vld [vmem:[#allocation2 + $0x88] sm:$0xff]
    %v1261 = vld [vmem:[#allocation2 + $0x90] sm:$0xff]
    %v1262 = vld [vmem:[#allocation2 + $0x98] sm:$0xff]
    %v1263 = vld [vmem:[#allocation2 + $0xa0] sm:$0xff]
    %v1264 = vld [vmem:[#allocation2 + $0xa8] sm:$0xff]
    %v1265 = vld [vmem:[#allocation2 + $0xb0] sm:$0xff]
    %v1266 = vld [vmem:[#allocation2 + $0xb8] sm:$0xff]
    %v1267 = vld [vmem:[#allocation2 + $0xc0] sm:$0xff]
    %v1268 = vld [vmem:[#allocation2 + $0xc8] sm:$0xff]
    %v1269 = vld [vmem:[#allocation2 + $0xd0] sm:$0xff]
    %v1270 = vld [vmem:[#allocation2 + $0xd8] sm:$0xff]
    %v1271 = vld [vmem:[#allocation2 + $0xe0] sm:$0xff]
    %v1272 = vld [vmem:[#allocation2 + $0xe8] sm:$0xff]
    %v1273 = vld [vmem:[#allocation2 + $0xf0] sm:$0xff]
    %v1274 = vld [vmem:[#allocation2 + $0xf8] sm:$0xff]
    %v1275 = vld [vmem:[#allocation2 + $0x100] sm:$0xff]
    %v1276 = vld [vmem:[#allocation2 + $0x108] sm:$0xff]
    %v1277 = vld [vmem:[#allocation2 + $0x110] sm:$0xff]
    %v1278 = vld [vmem:[#allocation2 + $0x118] sm:$0xff]
    %v1279 = vld [vmem:[#allocation2 + $0x120] sm:$0xff]
    %v1280 = vld [vmem:[#allocation2 + $0x128] sm:$0xff]
    %v1281 = vld [vmem:[#allocation2 + $0x130] sm:$0xff]
    %v1282 = vld [vmem:[#allocation2 + $0x138] sm:$0xff]
    %v1283 = vld [vmem:[#allocation2 + $0x140] sm:$0xff]
    %v1284 = vld [vmem:[#allocation2 + $0x148] sm:$0xff]
    %v1285 = vld [vmem:[#allocation2 + $0x150] sm:$0xff]
    %v1286 = vld [vmem:[#allocation2 + $0x158] sm:$0xff]
    %v1287 = vld [vmem:[#allocation2 + $0x160] sm:$0xff]
    %v1288 = vld [vmem:[#allocation2 + $0x168] sm:$0xff]
    %v1289 = vld [vmem:[#allocation2 + $0x170] sm:$0xff]
    %v1290 = vld [vmem:[#allocation2 + $0x178] sm:$0xff]
    %s1291 = scalar_lea.vmem [#allocation7], 6
    %v1292 = vld [vmem:[%s1291] ss:$8 sm:$0x3]
    %v1294 = vperm.slane %v1292, 0
    %v1295 = vperm.slane %v1292, 1
    %v1346 = vunpack.c.l.b16 %v1243
    %v1347 = vunpack.c.h.b16 %v1243
    %v1348 = vunpack.c.l.b16 %v1244
    %v1349 = vunpack.c.h.b16 %v1244
    %v1350 = vunpack.c.l.b16 %v1245
    %v1351 = vunpack.c.h.b16 %v1245
    %v1352 = vunpack.c.l.b16 %v1246
    %v1353 = vunpack.c.h.b16 %v1246
    %v1354 = vunpack.c.l.b16 %v1247
    %v1355 = vunpack.c.h.b16 %v1247
    %v1356 = vunpack.c.l.b16 %v1248
    %v1357 = vunpack.c.h.b16 %v1248
    %v1358 = vunpack.c.l.b16 %v1249
    %v1359 = vunpack.c.h.b16 %v1249
    %v1360 = vunpack.c.l.b16 %v1250
    %v1361 = vunpack.c.h.b16 %v1250
    %v1362 = vunpack.c.l.b16 %v1251
    %v1363 = vunpack.c.h.b16 %v1251
    %v1364 = vunpack.c.l.b16 %v1252
    %v1365 = vunpack.c.h.b16 %v1252
    %v1366 = vunpack.c.l.b16 %v1253
    %v1367 = vunpack.c.h.b16 %v1253
    %v1368 = vunpack.c.l.b16 %v1254
    %v1369 = vunpack.c.h.b16 %v1254
    %v1370 = vunpack.c.l.b16 %v1255
    %v1371 = vunpack.c.h.b16 %v1255
    %v1372 = vunpack.c.l.b16 %v1256
    %v1373 = vunpack.c.h.b16 %v1256
    %v1374 = vunpack.c.l.b16 %v1257
    %v1375 = vunpack.c.h.b16 %v1257
    %v1376 = vunpack.c.l.b16 %v1258
    %v1377 = vunpack.c.h.b16 %v1258
    %v1378 = vunpack.c.l.b16 %v1259
    %v1379 = vunpack.c.h.b16 %v1259
    %v1380 = vunpack.c.l.b16 %v1260
    %v1381 = vunpack.c.h.b16 %v1260
    %v1382 = vunpack.c.l.b16 %v1261
    %v1383 = vunpack.c.h.b16 %v1261
    %v1384 = vunpack.c.l.b16 %v1262
    %v1385 = vunpack.c.h.b16 %v1262
    %v1386 = vunpack.c.l.b16 %v1263
    %v1387 = vunpack.c.h.b16 %v1263
    %v1388 = vunpack.c.l.b16 %v1264
    %v1389 = vunpack.c.h.b16 %v1264
    %v1390 = vunpack.c.l.b16 %v1265
    %v1391 = vunpack.c.h.b16 %v1265
    %v1392 = vunpack.c.l.b16 %v1266
    %v1393 = vunpack.c.h.b16 %v1266
    %v1394 = vunpack.c.l.b16 %v1267
    %v1395 = vunpack.c.h.b16 %v1267
    %v1396 = vunpack.c.l.b16 %v1268
    %v1397 = vunpack.c.h.b16 %v1268
    %v1398 = vunpack.c.l.b16 %v1269
    %v1399 = vunpack.c.h.b16 %v1269
    %v1400 = vunpack.c.l.b16 %v1270
    %v1401 = vunpack.c.h.b16 %v1270
    %v1402 = vunpack.c.l.b16 %v1271
    %v1403 = vunpack.c.h.b16 %v1271
    %v1404 = vunpack.c.l.b16 %v1272
    %v1405 = vunpack.c.h.b16 %v1272
    %v1406 = vunpack.c.l.b16 %v1273
    %v1407 = vunpack.c.h.b16 %v1273
    %v1408 = vunpack.c.l.b16 %v1274
    %v1409 = vunpack.c.h.b16 %v1274
    %v1410 = vunpack.c.l.b16 %v1275
    %v1411 = vunpack.c.h.b16 %v1275
    %v1412 = vunpack.c.l.b16 %v1276
    %v1413 = vunpack.c.h.b16 %v1276
    %v1414 = vunpack.c.l.b16 %v1277
    %v1415 = vunpack.c.h.b16 %v1277
    %v1416 = vunpack.c.l.b16 %v1278
    %v1417 = vunpack.c.h.b16 %v1278
    %v1418 = vunpack.c.l.b16 %v1279
    %v1419 = vunpack.c.h.b16 %v1279
    %v1420 = vunpack.c.l.b16 %v1280
    %v1421 = vunpack.c.h.b16 %v1280
    %v1422 = vunpack.c.l.b16 %v1281
    %v1423 = vunpack.c.h.b16 %v1281
    %v1424 = vunpack.c.l.b16 %v1282
    %v1425 = vunpack.c.h.b16 %v1282
    %v1426 = vunpack.c.l.b16 %v1283
    %v1427 = vunpack.c.h.b16 %v1283
    %v1428 = vunpack.c.l.b16 %v1284
    %v1429 = vunpack.c.h.b16 %v1284
    %v1430 = vunpack.c.l.b16 %v1285
    %v1431 = vunpack.c.h.b16 %v1285
    %v1432 = vunpack.c.l.b16 %v1286
    %v1433 = vunpack.c.h.b16 %v1286
    %v1434 = vunpack.c.l.b16 %v1287
    %v1435 = vunpack.c.h.b16 %v1287
    %v1436 = vunpack.c.l.b16 %v1288
    %v1437 = vunpack.c.h.b16 %v1288
    %v1438 = vunpack.c.l.b16 %v1289
    %v1439 = vunpack.c.h.b16 %v1289
    %v1440 = vunpack.c.l.b16 %v1290
    %v1441 = vunpack.c.h.b16 %v1290
    %v1442 = vpack.c.b16 %v1348, %v1346
    %v1443 = vpack.c.b16 %v1349, %v1347
    %v1444 = vpack.c.b16 %v1352, %v1350
    %v1445 = vpack.c.b16 %v1353, %v1351
    %v1446 = vpack.c.b16 %v1356, %v1354
    %v1447 = vpack.c.b16 %v1357, %v1355
    %v1448 = vpack.c.b16 %v1360, %v1358
    %v1449 = vpack.c.b16 %v1361, %v1359
    %v1450 = vpack.c.b16 %v1364, %v1362
    %v1451 = vpack.c.b16 %v1365, %v1363
    %v1452 = vpack.c.b16 %v1368, %v1366
    %v1453 = vpack.c.b16 %v1369, %v1367
    %v1454 = vpack.c.b16 %v1372, %v1370
    %v1455 = vpack.c.b16 %v1373, %v1371
    %v1456 = vpack.c.b16 %v1376, %v1374
    %v1457 = vpack.c.b16 %v1377, %v1375
    %v1458 = vpack.c.b16 %v1380, %v1378
    %v1459 = vpack.c.b16 %v1381, %v1379
    %v1460 = vpack.c.b16 %v1384, %v1382
    %v1461 = vpack.c.b16 %v1385, %v1383
    %v1462 = vpack.c.b16 %v1388, %v1386
    %v1463 = vpack.c.b16 %v1389, %v1387
    %v1464 = vpack.c.b16 %v1392, %v1390
    %v1465 = vpack.c.b16 %v1393, %v1391
    %v1466 = vpack.c.b16 %v1396, %v1394
    %v1467 = vpack.c.b16 %v1397, %v1395
    %v1468 = vpack.c.b16 %v1400, %v1398
    %v1469 = vpack.c.b16 %v1401, %v1399
    %v1470 = vpack.c.b16 %v1404, %v1402
    %v1471 = vpack.c.b16 %v1405, %v1403
    %v1472 = vpack.c.b16 %v1408, %v1406
    %v1473 = vpack.c.b16 %v1409, %v1407
    %v1474 = vpack.c.b16 %v1412, %v1410
    %v1475 = vpack.c.b16 %v1413, %v1411
    %v1476 = vpack.c.b16 %v1416, %v1414
    %v1477 = vpack.c.b16 %v1417, %v1415
    %v1478 = vpack.c.b16 %v1420, %v1418
    %v1479 = vpack.c.b16 %v1421, %v1419
    %v1480 = vpack.c.b16 %v1424, %v1422
    %v1481 = vpack.c.b16 %v1425, %v1423
    %v1482 = vpack.c.b16 %v1428, %v1426
    %v1483 = vpack.c.b16 %v1429, %v1427
    %v1484 = vpack.c.b16 %v1432, %v1430
    %v1485 = vpack.c.b16 %v1433, %v1431
    %v1486 = vpack.c.b16 %v1436, %v1434
    %v1487 = vpack.c.b16 %v1437, %v1435
    %v1488 = vpack.c.b16 %v1440, %v1438
    %v1489 = vpack.c.b16 %v1441, %v1439
    %1538 = vmatpush.bf16.msra.mxu0 %v1456
    %1539 = vmatpush.bf16.msra.mxu0 %v1454
    %1540 = vmatpush.bf16.msra.mxu0 %v1452
    %1541 = vmatpush.bf16.msra.mxu0 %v1450
    %1542 = vmatpush.bf16.msra.mxu0 %v1448
    %1543 = vmatpush.bf16.msra.mxu0 %v1446
    %1544 = vmatpush.bf16.msra.mxu0 %v1444
    %1545 = vmatpush.bf16.msra.mxu0 %v1442
    %1546 = vmatmul.bf16.gmra.mxu0 %v1230
    %v1547 = vpop.f32.mrf.mxu0
    %v1548 = vadd.f32 %v1294, %v1547
    %v1549 = vpop.f32.mrf.mxu0
    %1550 = vdwg.mxu0
    %1551 = vmatpush.bf16.msra.mxu0 %v1472
    %1552 = vmatpush.bf16.msra.mxu0 %v1470
    %1553 = vmatpush.bf16.msra.mxu0 %v1468
    %1554 = vmatpush.bf16.msra.mxu0 %v1466
    %1555 = vmatpush.bf16.msra.mxu0 %v1464
    %1556 = vmatpush.bf16.msra.mxu0 %v1462
    %1557 = vmatpush.bf16.msra.mxu0 %v1460
    %1558 = vmatpush.bf16.msra.mxu0 %v1458
    %1559 = vmatmul.bf16.gmra.mxu0 %v1234
    %v1560 = vpop.f32.mrf.mxu0
    %v1561 = vadd.f32 %v1548, %v1560
    %v1562 = vpop.f32.mrf.mxu0
    %1563 = vdwg.mxu0
    %1564 = vmatpush.bf16.msra.mxu0 %v1488
    %1565 = vmatpush.bf16.msra.mxu0 %v1486
    %1566 = vmatpush.bf16.msra.mxu0 %v1484
    %1567 = vmatpush.bf16.msra.mxu0 %v1482
    %1568 = vmatpush.bf16.msra.mxu0 %v1480
    %1569 = vmatpush.bf16.msra.mxu0 %v1478
    %1570 = vmatpush.bf16.msra.mxu0 %v1476
    %1571 = vmatpush.bf16.msra.mxu0 %v1474
    %1572 = vmatmul.bf16.gmra.mxu0 %v1237
    %v1573 = vpop.f32.mrf.mxu0
    %v1574 = vadd.f32 %v1561, %v1573
    %v1575 = vpop.f32.mrf.mxu0
    %1576 = vdwg.mxu0
    %1577 = vmatpush.bf16.msra.mxu0 %v1457
    %1578 = vmatpush.bf16.msra.mxu0 %v1455
    %1579 = vmatpush.bf16.msra.mxu0 %v1453
    %1580 = vmatpush.bf16.msra.mxu0 %v1451
    %1581 = vmatpush.bf16.msra.mxu0 %v1449
    %1582 = vmatpush.bf16.msra.mxu0 %v1447
    %1583 = vmatpush.bf16.msra.mxu0 %v1445
    %1584 = vmatpush.bf16.msra.mxu0 %v1443
    %1585 = vmatmul.bf16.gmra.mxu0 %v1230
    %v1586 = vpop.f32.mrf.mxu0
    %v1587 = vadd.f32 %v1295, %v1586
    %v1588 = vpop.f32.mrf.mxu0
    %1589 = vdwg.mxu0
    %1590 = vmatpush.bf16.msra.mxu0 %v1473
    %1591 = vmatpush.bf16.msra.mxu0 %v1471
    %1592 = vmatpush.bf16.msra.mxu0 %v1469
    %1593 = vmatpush.bf16.msra.mxu0 %v1467
    %1594 = vmatpush.bf16.msra.mxu0 %v1465
    %1595 = vmatpush.bf16.msra.mxu0 %v1463
    %1596 = vmatpush.bf16.msra.mxu0 %v1461
    %1597 = vmatpush.bf16.msra.mxu0 %v1459
    %1598 = vmatmul.bf16.gmra.mxu0 %v1234
    %v1599 = vpop.f32.mrf.mxu0
    %v1600 = vadd.f32 %v1587, %v1599
    %v1601 = vpop.f32.mrf.mxu0
    %1602 = vdwg.mxu0
    %1603 = vmatpush.bf16.msra.mxu0 %v1489
    %1604 = vmatpush.bf16.msra.mxu0 %v1487
    %1605 = vmatpush.bf16.msra.mxu0 %v1485
    %1606 = vmatpush.bf16.msra.mxu0 %v1483
    %1607 = vmatpush.bf16.msra.mxu0 %v1481
    %1608 = vmatpush.bf16.msra.mxu0 %v1479
    %1609 = vmatpush.bf16.msra.mxu0 %v1477
    %1610 = vmatpush.bf16.msra.mxu0 %v1475
    %1611 = vmatmul.bf16.gmra.mxu0 %v1237
    %v1612 = vpop.f32.mrf.mxu0
    %v1613 = vadd.f32 %v1600, %v1612
    %v1614 = vpop.f32.mrf.mxu0
    %1615 = vdwg.mxu0
    %v1616 = vmax.f32 %v1574, 0.0
    %v1617 = vmax.f32 %v1613, 0.0
    %v1618 = vpack.c.bf16 %v1617, %v1616
    %v1620 = vunpack.c.l.b16 %v1618
    %v1621 = vunpack.c.h.b16 %v1618
    %v1622 = vpack.c.b16 %v1620, %v1620
    %v1623 = vpack.c.b16 %v1621, %v1621
    %v1624 = vrot.slane %v1622, 7
    %v1625 = vrot.slane %v1623, 7
    %v1627 = vsel %vm298, 0, %v1624
    %v1630 = vsel %vm298, 0, %v1625
    %v1632 = vrot.slane %v1622, 1
    %v1633 = vrot.slane %v1623, 1
    %v1635 = vsel %vm298, %v1632, 0
    %v1638 = vsel %vm298, %v1633, 0
    %v1642 = vld [vmem:[#allocation2 + $0x180] sm:$0xff]
    %v1643 = vld [vmem:[#allocation2 + $0x188] sm:$0xff]
    %v1644 = vld [vmem:[#allocation2 + $0x190] sm:$0xff]
    %v1645 = vld [vmem:[#allocation2 + $0x198] sm:$0xff]
    %v1646 = vld [vmem:[#allocation2 + $0x1a0] sm:$0xff]
    %v1647 = vld [vmem:[#allocation2 + $0x1a8] sm:$0xff]
    %v1648 = vld [vmem:[#allocation2 + $0x1b0] sm:$0xff]
    %v1649 = vld [vmem:[#allocation2 + $0x1b8] sm:$0xff]
    %v1650 = vld [vmem:[#allocation2 + $0x1c0] sm:$0xff]
    %v1651 = vld [vmem:[#allocation2 + $0x1c8] sm:$0xff]
    %v1652 = vld [vmem:[#allocation2 + $0x1d0] sm:$0xff]
    %v1653 = vld [vmem:[#allocation2 + $0x1d8] sm:$0xff]
    %v1654 = vld [vmem:[#allocation2 + $0x1e0] sm:$0xff]
    %v1655 = vld [vmem:[#allocation2 + $0x1e8] sm:$0xff]
    %v1656 = vld [vmem:[#allocation2 + $0x1f0] sm:$0xff]
    %v1657 = vld [vmem:[#allocation2 + $0x1f8] sm:$0xff]
    %v1658 = vld [vmem:[#allocation2 + $0x200] sm:$0xff]
    %v1659 = vld [vmem:[#allocation2 + $0x208] sm:$0xff]
    %v1660 = vld [vmem:[#allocation2 + $0x210] sm:$0xff]
    %v1661 = vld [vmem:[#allocation2 + $0x218] sm:$0xff]
    %v1662 = vld [vmem:[#allocation2 + $0x220] sm:$0xff]
    %v1663 = vld [vmem:[#allocation2 + $0x228] sm:$0xff]
    %v1664 = vld [vmem:[#allocation2 + $0x230] sm:$0xff]
    %v1665 = vld [vmem:[#allocation2 + $0x238] sm:$0xff]
    %v1666 = vld [vmem:[#allocation2 + $0x240] sm:$0xff]
    %v1667 = vld [vmem:[#allocation2 + $0x248] sm:$0xff]
    %v1668 = vld [vmem:[#allocation2 + $0x250] sm:$0xff]
    %v1669 = vld [vmem:[#allocation2 + $0x258] sm:$0xff]
    %v1670 = vld [vmem:[#allocation2 + $0x260] sm:$0xff]
    %v1671 = vld [vmem:[#allocation2 + $0x268] sm:$0xff]
    %v1672 = vld [vmem:[#allocation2 + $0x270] sm:$0xff]
    %v1673 = vld [vmem:[#allocation2 + $0x278] sm:$0xff]
    %v1674 = vld [vmem:[#allocation2 + $0x280] sm:$0xff]
    %v1675 = vld [vmem:[#allocation2 + $0x288] sm:$0xff]
    %v1676 = vld [vmem:[#allocation2 + $0x290] sm:$0xff]
    %v1677 = vld [vmem:[#allocation2 + $0x298] sm:$0xff]
    %v1678 = vld [vmem:[#allocation2 + $0x2a0] sm:$0xff]
    %v1679 = vld [vmem:[#allocation2 + $0x2a8] sm:$0xff]
    %v1680 = vld [vmem:[#allocation2 + $0x2b0] sm:$0xff]
    %v1681 = vld [vmem:[#allocation2 + $0x2b8] sm:$0xff]
    %v1682 = vld [vmem:[#allocation2 + $0x2c0] sm:$0xff]
    %v1683 = vld [vmem:[#allocation2 + $0x2c8] sm:$0xff]
    %v1684 = vld [vmem:[#allocation2 + $0x2d0] sm:$0xff]
    %v1685 = vld [vmem:[#allocation2 + $0x2d8] sm:$0xff]
    %v1686 = vld [vmem:[#allocation2 + $0x2e0] sm:$0xff]
    %v1687 = vld [vmem:[#allocation2 + $0x2e8] sm:$0xff]
    %v1688 = vld [vmem:[#allocation2 + $0x2f0] sm:$0xff]
    %v1689 = vld [vmem:[#allocation2 + $0x2f8] sm:$0xff]
    %v1690 = vld [vmem:[#allocation2 + $0x300] sm:$0xff]
    %v1691 = vld [vmem:[#allocation2 + $0x308] sm:$0xff]
    %v1692 = vld [vmem:[#allocation2 + $0x310] sm:$0xff]
    %v1693 = vld [vmem:[#allocation2 + $0x318] sm:$0xff]
    %v1694 = vld [vmem:[#allocation2 + $0x320] sm:$0xff]
    %v1695 = vld [vmem:[#allocation2 + $0x328] sm:$0xff]
    %v1696 = vld [vmem:[#allocation2 + $0x330] sm:$0xff]
    %v1697 = vld [vmem:[#allocation2 + $0x338] sm:$0xff]
    %v1698 = vld [vmem:[#allocation2 + $0x340] sm:$0xff]
    %v1699 = vld [vmem:[#allocation2 + $0x348] sm:$0xff]
    %v1700 = vld [vmem:[#allocation2 + $0x350] sm:$0xff]
    %v1701 = vld [vmem:[#allocation2 + $0x358] sm:$0xff]
    %v1702 = vld [vmem:[#allocation2 + $0x360] sm:$0xff]
    %v1703 = vld [vmem:[#allocation2 + $0x368] sm:$0xff]
    %v1704 = vld [vmem:[#allocation2 + $0x370] sm:$0xff]
    %v1705 = vld [vmem:[#allocation2 + $0x378] sm:$0xff]
    %v1706 = vld [vmem:[#allocation2 + $0x380] sm:$0xff]
    %v1707 = vld [vmem:[#allocation2 + $0x388] sm:$0xff]
    %v1708 = vld [vmem:[#allocation2 + $0x390] sm:$0xff]
    %v1709 = vld [vmem:[#allocation2 + $0x398] sm:$0xff]
    %v1710 = vld [vmem:[#allocation2 + $0x3a0] sm:$0xff]
    %v1711 = vld [vmem:[#allocation2 + $0x3a8] sm:$0xff]
    %v1712 = vld [vmem:[#allocation2 + $0x3b0] sm:$0xff]
    %v1713 = vld [vmem:[#allocation2 + $0x3b8] sm:$0xff]
    %v1714 = vld [vmem:[#allocation2 + $0x3c0] sm:$0xff]
    %v1715 = vld [vmem:[#allocation2 + $0x3c8] sm:$0xff]
    %v1716 = vld [vmem:[#allocation2 + $0x3d0] sm:$0xff]
    %v1717 = vld [vmem:[#allocation2 + $0x3d8] sm:$0xff]
    %v1718 = vld [vmem:[#allocation2 + $0x3e0] sm:$0xff]
    %v1719 = vld [vmem:[#allocation2 + $0x3e8] sm:$0xff]
    %v1720 = vld [vmem:[#allocation2 + $0x3f0] sm:$0xff]
    %v1721 = vld [vmem:[#allocation2 + $0x3f8] sm:$0xff]
    %v1722 = vld [vmem:[#allocation2 + $0x400] sm:$0xff]
    %v1723 = vld [vmem:[#allocation2 + $0x408] sm:$0xff]
    %v1724 = vld [vmem:[#allocation2 + $0x410] sm:$0xff]
    %v1725 = vld [vmem:[#allocation2 + $0x418] sm:$0xff]
    %v1726 = vld [vmem:[#allocation2 + $0x420] sm:$0xff]
    %v1727 = vld [vmem:[#allocation2 + $0x428] sm:$0xff]
    %v1728 = vld [vmem:[#allocation2 + $0x430] sm:$0xff]
    %v1729 = vld [vmem:[#allocation2 + $0x438] sm:$0xff]
    %v1730 = vld [vmem:[#allocation2 + $0x440] sm:$0xff]
    %v1731 = vld [vmem:[#allocation2 + $0x448] sm:$0xff]
    %v1732 = vld [vmem:[#allocation2 + $0x450] sm:$0xff]
    %v1733 = vld [vmem:[#allocation2 + $0x458] sm:$0xff]
    %v1734 = vld [vmem:[#allocation2 + $0x460] sm:$0xff]
    %v1735 = vld [vmem:[#allocation2 + $0x468] sm:$0xff]
    %v1736 = vld [vmem:[#allocation2 + $0x470] sm:$0xff]
    %v1737 = vld [vmem:[#allocation2 + $0x478] sm:$0xff]
    %s1738 = scalar_lea.vmem [#allocation7], 7
    %v1739 = vld [vmem:[%s1738] ss:$8 sm:$0x3]
    %v1741 = vperm.slane %v1739, 0
    %v1742 = vperm.slane %v1739, 1
    %v1841 = vunpack.c.l.b16 %v1642
    %v1842 = vunpack.c.h.b16 %v1642
    %v1843 = vunpack.c.l.b16 %v1643
    %v1844 = vunpack.c.h.b16 %v1643
    %v1845 = vunpack.c.l.b16 %v1644
    %v1846 = vunpack.c.h.b16 %v1644
    %v1847 = vunpack.c.l.b16 %v1645
    %v1848 = vunpack.c.h.b16 %v1645
    %v1849 = vunpack.c.l.b16 %v1646
    %v1850 = vunpack.c.h.b16 %v1646
    %v1851 = vunpack.c.l.b16 %v1647
    %v1852 = vunpack.c.h.b16 %v1647
    %v1853 = vunpack.c.l.b16 %v1648
    %v1854 = vunpack.c.h.b16 %v1648
    %v1855 = vunpack.c.l.b16 %v1649
    %v1856 = vunpack.c.h.b16 %v1649
    %v1857 = vunpack.c.l.b16 %v1650
    %v1858 = vunpack.c.h.b16 %v1650
    %v1859 = vunpack.c.l.b16 %v1651
    %v1860 = vunpack.c.h.b16 %v1651
    %v1861 = vunpack.c.l.b16 %v1652
    %v1862 = vunpack.c.h.b16 %v1652
    %v1863 = vunpack.c.l.b16 %v1653
    %v1864 = vunpack.c.h.b16 %v1653
    %v1865 = vunpack.c.l.b16 %v1654
    %v1866 = vunpack.c.h.b16 %v1654
    %v1867 = vunpack.c.l.b16 %v1655
    %v1868 = vunpack.c.h.b16 %v1655
    %v1869 = vunpack.c.l.b16 %v1656
    %v1870 = vunpack.c.h.b16 %v1656
    %v1871 = vunpack.c.l.b16 %v1657
    %v1872 = vunpack.c.h.b16 %v1657
    %v1873 = vunpack.c.l.b16 %v1658
    %v1874 = vunpack.c.h.b16 %v1658
    %v1875 = vunpack.c.l.b16 %v1659
    %v1876 = vunpack.c.h.b16 %v1659
    %v1877 = vunpack.c.l.b16 %v1660
    %v1878 = vunpack.c.h.b16 %v1660
    %v1879 = vunpack.c.l.b16 %v1661
    %v1880 = vunpack.c.h.b16 %v1661
    %v1881 = vunpack.c.l.b16 %v1662
    %v1882 = vunpack.c.h.b16 %v1662
    %v1883 = vunpack.c.l.b16 %v1663
    %v1884 = vunpack.c.h.b16 %v1663
    %v1885 = vunpack.c.l.b16 %v1664
    %v1886 = vunpack.c.h.b16 %v1664
    %v1887 = vunpack.c.l.b16 %v1665
    %v1888 = vunpack.c.h.b16 %v1665
    %v1889 = vunpack.c.l.b16 %v1666
    %v1890 = vunpack.c.h.b16 %v1666
    %v1891 = vunpack.c.l.b16 %v1667
    %v1892 = vunpack.c.h.b16 %v1667
    %v1893 = vunpack.c.l.b16 %v1668
    %v1894 = vunpack.c.h.b16 %v1668
    %v1895 = vunpack.c.l.b16 %v1669
    %v1896 = vunpack.c.h.b16 %v1669
    %v1897 = vunpack.c.l.b16 %v1670
    %v1898 = vunpack.c.h.b16 %v1670
    %v1899 = vunpack.c.l.b16 %v1671
    %v1900 = vunpack.c.h.b16 %v1671
    %v1901 = vunpack.c.l.b16 %v1672
    %v1902 = vunpack.c.h.b16 %v1672
    %v1903 = vunpack.c.l.b16 %v1673
    %v1904 = vunpack.c.h.b16 %v1673
    %v1905 = vunpack.c.l.b16 %v1674
    %v1906 = vunpack.c.h.b16 %v1674
    %v1907 = vunpack.c.l.b16 %v1675
    %v1908 = vunpack.c.h.b16 %v1675
    %v1909 = vunpack.c.l.b16 %v1676
    %v1910 = vunpack.c.h.b16 %v1676
    %v1911 = vunpack.c.l.b16 %v1677
    %v1912 = vunpack.c.h.b16 %v1677
    %v1913 = vunpack.c.l.b16 %v1678
    %v1914 = vunpack.c.h.b16 %v1678
    %v1915 = vunpack.c.l.b16 %v1679
    %v1916 = vunpack.c.h.b16 %v1679
    %v1917 = vunpack.c.l.b16 %v1680
    %v1918 = vunpack.c.h.b16 %v1680
    %v1919 = vunpack.c.l.b16 %v1681
    %v1920 = vunpack.c.h.b16 %v1681
    %v1921 = vunpack.c.l.b16 %v1682
    %v1922 = vunpack.c.h.b16 %v1682
    %v1923 = vunpack.c.l.b16 %v1683
    %v1924 = vunpack.c.h.b16 %v1683
    %v1925 = vunpack.c.l.b16 %v1684
    %v1926 = vunpack.c.h.b16 %v1684
    %v1927 = vunpack.c.l.b16 %v1685
    %v1928 = vunpack.c.h.b16 %v1685
    %v1929 = vunpack.c.l.b16 %v1686
    %v1930 = vunpack.c.h.b16 %v1686
    %v1931 = vunpack.c.l.b16 %v1687
    %v1932 = vunpack.c.h.b16 %v1687
    %v1933 = vunpack.c.l.b16 %v1688
    %v1934 = vunpack.c.h.b16 %v1688
    %v1935 = vunpack.c.l.b16 %v1689
    %v1936 = vunpack.c.h.b16 %v1689
    %v1937 = vunpack.c.l.b16 %v1690
    %v1938 = vunpack.c.h.b16 %v1690
    %v1939 = vunpack.c.l.b16 %v1691
    %v1940 = vunpack.c.h.b16 %v1691
    %v1941 = vunpack.c.l.b16 %v1692
    %v1942 = vunpack.c.h.b16 %v1692
    %v1943 = vunpack.c.l.b16 %v1693
    %v1944 = vunpack.c.h.b16 %v1693
    %v1945 = vunpack.c.l.b16 %v1694
    %v1946 = vunpack.c.h.b16 %v1694
    %v1947 = vunpack.c.l.b16 %v1695
    %v1948 = vunpack.c.h.b16 %v1695
    %v1949 = vunpack.c.l.b16 %v1696
    %v1950 = vunpack.c.h.b16 %v1696
    %v1951 = vunpack.c.l.b16 %v1697
    %v1952 = vunpack.c.h.b16 %v1697
    %v1953 = vunpack.c.l.b16 %v1698
    %v1954 = vunpack.c.h.b16 %v1698
    %v1955 = vunpack.c.l.b16 %v1699
    %v1956 = vunpack.c.h.b16 %v1699
    %v1957 = vunpack.c.l.b16 %v1700
    %v1958 = vunpack.c.h.b16 %v1700
    %v1959 = vunpack.c.l.b16 %v1701
    %v1960 = vunpack.c.h.b16 %v1701
    %v1961 = vunpack.c.l.b16 %v1702
    %v1962 = vunpack.c.h.b16 %v1702
    %v1963 = vunpack.c.l.b16 %v1703
    %v1964 = vunpack.c.h.b16 %v1703
    %v1965 = vunpack.c.l.b16 %v1704
    %v1966 = vunpack.c.h.b16 %v1704
    %v1967 = vunpack.c.l.b16 %v1705
    %v1968 = vunpack.c.h.b16 %v1705
    %v1969 = vunpack.c.l.b16 %v1706
    %v1970 = vunpack.c.h.b16 %v1706
    %v1971 = vunpack.c.l.b16 %v1707
    %v1972 = vunpack.c.h.b16 %v1707
    %v1973 = vunpack.c.l.b16 %v1708
    %v1974 = vunpack.c.h.b16 %v1708
    %v1975 = vunpack.c.l.b16 %v1709
    %v1976 = vunpack.c.h.b16 %v1709
    %v1977 = vunpack.c.l.b16 %v1710
    %v1978 = vunpack.c.h.b16 %v1710
    %v1979 = vunpack.c.l.b16 %v1711
    %v1980 = vunpack.c.h.b16 %v1711
    %v1981 = vunpack.c.l.b16 %v1712
    %v1982 = vunpack.c.h.b16 %v1712
    %v1983 = vunpack.c.l.b16 %v1713
    %v1984 = vunpack.c.h.b16 %v1713
    %v1985 = vunpack.c.l.b16 %v1714
    %v1986 = vunpack.c.h.b16 %v1714
    %v1987 = vunpack.c.l.b16 %v1715
    %v1988 = vunpack.c.h.b16 %v1715
    %v1989 = vunpack.c.l.b16 %v1716
    %v1990 = vunpack.c.h.b16 %v1716
    %v1991 = vunpack.c.l.b16 %v1717
    %v1992 = vunpack.c.h.b16 %v1717
    %v1993 = vunpack.c.l.b16 %v1718
    %v1994 = vunpack.c.h.b16 %v1718
    %v1995 = vunpack.c.l.b16 %v1719
    %v1996 = vunpack.c.h.b16 %v1719
    %v1997 = vunpack.c.l.b16 %v1720
    %v1998 = vunpack.c.h.b16 %v1720
    %v1999 = vunpack.c.l.b16 %v1721
    %v2000 = vunpack.c.h.b16 %v1721
    %v2001 = vunpack.c.l.b16 %v1722
    %v2002 = vunpack.c.h.b16 %v1722
    %v2003 = vunpack.c.l.b16 %v1723
    %v2004 = vunpack.c.h.b16 %v1723
    %v2005 = vunpack.c.l.b16 %v1724
    %v2006 = vunpack.c.h.b16 %v1724
    %v2007 = vunpack.c.l.b16 %v1725
    %v2008 = vunpack.c.h.b16 %v1725
    %v2009 = vunpack.c.l.b16 %v1726
    %v2010 = vunpack.c.h.b16 %v1726
    %v2011 = vunpack.c.l.b16 %v1727
    %v2012 = vunpack.c.h.b16 %v1727
    %v2013 = vunpack.c.l.b16 %v1728
    %v2014 = vunpack.c.h.b16 %v1728
    %v2015 = vunpack.c.l.b16 %v1729
    %v2016 = vunpack.c.h.b16 %v1729
    %v2017 = vunpack.c.l.b16 %v1730
    %v2018 = vunpack.c.h.b16 %v1730
    %v2019 = vunpack.c.l.b16 %v1731
    %v2020 = vunpack.c.h.b16 %v1731
    %v2021 = vunpack.c.l.b16 %v1732
    %v2022 = vunpack.c.h.b16 %v1732
    %v2023 = vunpack.c.l.b16 %v1733
    %v2024 = vunpack.c.h.b16 %v1733
    %v2025 = vunpack.c.l.b16 %v1734
    %v2026 = vunpack.c.h.b16 %v1734
    %v2027 = vunpack.c.l.b16 %v1735
    %v2028 = vunpack.c.h.b16 %v1735
    %v2029 = vunpack.c.l.b16 %v1736
    %v2030 = vunpack.c.h.b16 %v1736
    %v2031 = vunpack.c.l.b16 %v1737
    %v2032 = vunpack.c.h.b16 %v1737
    %v2033 = vpack.c.b16 %v1843, %v1841
    %v2034 = vpack.c.b16 %v1844, %v1842
    %v2035 = vpack.c.b16 %v1847, %v1845
    %v2036 = vpack.c.b16 %v1848, %v1846
    %v2037 = vpack.c.b16 %v1851, %v1849
    %v2038 = vpack.c.b16 %v1852, %v1850
    %v2039 = vpack.c.b16 %v1855, %v1853
    %v2040 = vpack.c.b16 %v1856, %v1854
    %v2041 = vpack.c.b16 %v1859, %v1857
    %v2042 = vpack.c.b16 %v1860, %v1858
    %v2043 = vpack.c.b16 %v1863, %v1861
    %v2044 = vpack.c.b16 %v1864, %v1862
    %v2045 = vpack.c.b16 %v1867, %v1865
    %v2046 = vpack.c.b16 %v1868, %v1866
    %v2047 = vpack.c.b16 %v1871, %v1869
    %v2048 = vpack.c.b16 %v1872, %v1870
    %v2049 = vpack.c.b16 %v1875, %v1873
    %v2050 = vpack.c.b16 %v1876, %v1874
    %v2051 = vpack.c.b16 %v1879, %v1877
    %v2052 = vpack.c.b16 %v1880, %v1878
    %v2053 = vpack.c.b16 %v1883, %v1881
    %v2054 = vpack.c.b16 %v1884, %v1882
    %v2055 = vpack.c.b16 %v1887, %v1885
    %v2056 = vpack.c.b16 %v1888, %v1886
    %v2057 = vpack.c.b16 %v1891, %v1889
    %v2058 = vpack.c.b16 %v1892, %v1890
    %v2059 = vpack.c.b16 %v1895, %v1893
    %v2060 = vpack.c.b16 %v1896, %v1894
    %v2061 = vpack.c.b16 %v1899, %v1897
    %v2062 = vpack.c.b16 %v1900, %v1898
    %v2063 = vpack.c.b16 %v1903, %v1901
    %v2064 = vpack.c.b16 %v1904, %v1902
    %v2065 = vpack.c.b16 %v1907, %v1905
    %v2066 = vpack.c.b16 %v1908, %v1906
    %v2067 = vpack.c.b16 %v1911, %v1909
    %v2068 = vpack.c.b16 %v1912, %v1910
    %v2069 = vpack.c.b16 %v1915, %v1913
    %v2070 = vpack.c.b16 %v1916, %v1914
    %v2071 = vpack.c.b16 %v1919, %v1917
    %v2072 = vpack.c.b16 %v1920, %v1918
    %v2073 = vpack.c.b16 %v1923, %v1921
    %v2074 = vpack.c.b16 %v1924, %v1922
    %v2075 = vpack.c.b16 %v1927, %v1925
    %v2076 = vpack.c.b16 %v1928, %v1926
    %v2077 = vpack.c.b16 %v1931, %v1929
    %v2078 = vpack.c.b16 %v1932, %v1930
    %v2079 = vpack.c.b16 %v1935, %v1933
    %v2080 = vpack.c.b16 %v1936, %v1934
    %v2081 = vpack.c.b16 %v1939, %v1937
    %v2082 = vpack.c.b16 %v1940, %v1938
    %v2083 = vpack.c.b16 %v1943, %v1941
    %v2084 = vpack.c.b16 %v1944, %v1942
    %v2085 = vpack.c.b16 %v1947, %v1945
    %v2086 = vpack.c.b16 %v1948, %v1946
    %v2087 = vpack.c.b16 %v1951, %v1949
    %v2088 = vpack.c.b16 %v1952, %v1950
    %v2089 = vpack.c.b16 %v1955, %v1953
    %v2090 = vpack.c.b16 %v1956, %v1954
    %v2091 = vpack.c.b16 %v1959, %v1957
    %v2092 = vpack.c.b16 %v1960, %v1958
    %v2093 = vpack.c.b16 %v1963, %v1961
    %v2094 = vpack.c.b16 %v1964, %v1962
    %v2095 = vpack.c.b16 %v1967, %v1965
    %v2096 = vpack.c.b16 %v1968, %v1966
    %v2097 = vpack.c.b16 %v1971, %v1969
    %v2098 = vpack.c.b16 %v1972, %v1970
    %v2099 = vpack.c.b16 %v1975, %v1973
    %v2100 = vpack.c.b16 %v1976, %v1974
    %v2101 = vpack.c.b16 %v1979, %v1977
    %v2102 = vpack.c.b16 %v1980, %v1978
    %v2103 = vpack.c.b16 %v1983, %v1981
    %v2104 = vpack.c.b16 %v1984, %v1982
    %v2105 = vpack.c.b16 %v1987, %v1985
    %v2106 = vpack.c.b16 %v1988, %v1986
    %v2107 = vpack.c.b16 %v1991, %v1989
    %v2108 = vpack.c.b16 %v1992, %v1990
    %v2109 = vpack.c.b16 %v1995, %v1993
    %v2110 = vpack.c.b16 %v1996, %v1994
    %v2111 = vpack.c.b16 %v1999, %v1997
    %v2112 = vpack.c.b16 %v2000, %v1998
    %v2113 = vpack.c.b16 %v2003, %v2001
    %v2114 = vpack.c.b16 %v2004, %v2002
    %v2115 = vpack.c.b16 %v2007, %v2005
    %v2116 = vpack.c.b16 %v2008, %v2006
    %v2117 = vpack.c.b16 %v2011, %v2009
    %v2118 = vpack.c.b16 %v2012, %v2010
    %v2119 = vpack.c.b16 %v2015, %v2013
    %v2120 = vpack.c.b16 %v2016, %v2014
    %v2121 = vpack.c.b16 %v2019, %v2017
    %v2122 = vpack.c.b16 %v2020, %v2018
    %v2123 = vpack.c.b16 %v2023, %v2021
    %v2124 = vpack.c.b16 %v2024, %v2022
    %v2125 = vpack.c.b16 %v2027, %v2025
    %v2126 = vpack.c.b16 %v2028, %v2026
    %v2127 = vpack.c.b16 %v2031, %v2029
    %v2128 = vpack.c.b16 %v2032, %v2030
    %2225 = vmatpush.bf16.msra.mxu0 %v2047
    %2226 = vmatpush.bf16.msra.mxu0 %v2045
    %2227 = vmatpush.bf16.msra.mxu0 %v2043
    %2228 = vmatpush.bf16.msra.mxu0 %v2041
    %2229 = vmatpush.bf16.msra.mxu0 %v2039
    %2230 = vmatpush.bf16.msra.mxu0 %v2037
    %2231 = vmatpush.bf16.msra.mxu0 %v2035
    %2232 = vmatpush.bf16.msra.mxu0 %v2033
    %2233 = vmatmul.bf16.gmra.mxu0 %v1627
    %v2234 = vpop.f32.mrf.mxu0
    %v2235 = vadd.f32 %v1741, %v2234
    %v2236 = vpop.f32.mrf.mxu0
    %2237 = vdwg.mxu0
    %2238 = vmatpush.bf16.msra.mxu0 %v2063
    %2239 = vmatpush.bf16.msra.mxu0 %v2061
    %2240 = vmatpush.bf16.msra.mxu0 %v2059
    %2241 = vmatpush.bf16.msra.mxu0 %v2057
    %2242 = vmatpush.bf16.msra.mxu0 %v2055
    %2243 = vmatpush.bf16.msra.mxu0 %v2053
    %2244 = vmatpush.bf16.msra.mxu0 %v2051
    %2245 = vmatpush.bf16.msra.mxu0 %v2049
    %2246 = vmatmul.bf16.gmra.mxu0 %v1630
    %v2247 = vpop.f32.mrf.mxu0
    %v2248 = vadd.f32 %v2235, %v2247
    %v2249 = vpop.f32.mrf.mxu0
    %2250 = vdwg.mxu0
    %2251 = vmatpush.bf16.msra.mxu0 %v2079
    %2252 = vmatpush.bf16.msra.mxu0 %v2077
    %2253 = vmatpush.bf16.msra.mxu0 %v2075
    %2254 = vmatpush.bf16.msra.mxu0 %v2073
    %2255 = vmatpush.bf16.msra.mxu0 %v2071
    %2256 = vmatpush.bf16.msra.mxu0 %v2069
    %2257 = vmatpush.bf16.msra.mxu0 %v2067
    %2258 = vmatpush.bf16.msra.mxu0 %v2065
    %2259 = vmatmul.bf16.gmra.mxu0 %v1622
    %v2260 = vpop.f32.mrf.mxu0
    %v2261 = vadd.f32 %v2248, %v2260
    %v2262 = vpop.f32.mrf.mxu0
    %2263 = vdwg.mxu0
    %2264 = vmatpush.bf16.msra.mxu0 %v2095
    %2265 = vmatpush.bf16.msra.mxu0 %v2093
    %2266 = vmatpush.bf16.msra.mxu0 %v2091
    %2267 = vmatpush.bf16.msra.mxu0 %v2089
    %2268 = vmatpush.bf16.msra.mxu0 %v2087
    %2269 = vmatpush.bf16.msra.mxu0 %v2085
    %2270 = vmatpush.bf16.msra.mxu0 %v2083
    %2271 = vmatpush.bf16.msra.mxu0 %v2081
    %2272 = vmatmul.bf16.gmra.mxu0 %v1623
    %v2273 = vpop.f32.mrf.mxu0
    %v2274 = vadd.f32 %v2261, %v2273
    %v2275 = vpop.f32.mrf.mxu0
    %2276 = vdwg.mxu0
    %2277 = vmatpush.bf16.msra.mxu0 %v2111
    %2278 = vmatpush.bf16.msra.mxu0 %v2109
    %2279 = vmatpush.bf16.msra.mxu0 %v2107
    %2280 = vmatpush.bf16.msra.mxu0 %v2105
    %2281 = vmatpush.bf16.msra.mxu0 %v2103
    %2282 = vmatpush.bf16.msra.mxu0 %v2101
    %2283 = vmatpush.bf16.msra.mxu0 %v2099
    %2284 = vmatpush.bf16.msra.mxu0 %v2097
    %2285 = vmatmul.bf16.gmra.mxu0 %v1635
    %v2286 = vpop.f32.mrf.mxu0
    %v2287 = vadd.f32 %v2274, %v2286
    %v2288 = vpop.f32.mrf.mxu0
    %2289 = vdwg.mxu0
    %2290 = vmatpush.bf16.msra.mxu0 %v2127
    %2291 = vmatpush.bf16.msra.mxu0 %v2125
    %2292 = vmatpush.bf16.msra.mxu0 %v2123
    %2293 = vmatpush.bf16.msra.mxu0 %v2121
    %2294 = vmatpush.bf16.msra.mxu0 %v2119
    %2295 = vmatpush.bf16.msra.mxu0 %v2117
    %2296 = vmatpush.bf16.msra.mxu0 %v2115
    %2297 = vmatpush.bf16.msra.mxu0 %v2113
    %2298 = vmatmul.bf16.gmra.mxu0 %v1638
    %v2299 = vpop.f32.mrf.mxu0
    %v2300 = vadd.f32 %v2287, %v2299
    %v2301 = vpop.f32.mrf.mxu0
    %2302 = vdwg.mxu0
    %2303 = vmatpush.bf16.msra.mxu0 %v2048
    %2304 = vmatpush.bf16.msra.mxu0 %v2046
    %2305 = vmatpush.bf16.msra.mxu0 %v2044
    %2306 = vmatpush.bf16.msra.mxu0 %v2042
    %2307 = vmatpush.bf16.msra.mxu0 %v2040
    %2308 = vmatpush.bf16.msra.mxu0 %v2038
    %2309 = vmatpush.bf16.msra.mxu0 %v2036
    %2310 = vmatpush.bf16.msra.mxu0 %v2034
    %2311 = vmatmul.bf16.gmra.mxu0 %v1627
    %v2312 = vpop.f32.mrf.mxu0
    %v2313 = vadd.f32 %v1742, %v2312
    %v2314 = vpop.f32.mrf.mxu0
    %2315 = vdwg.mxu0
    %2316 = vmatpush.bf16.msra.mxu0 %v2064
    %2317 = vmatpush.bf16.msra.mxu0 %v2062
    %2318 = vmatpush.bf16.msra.mxu0 %v2060
    %2319 = vmatpush.bf16.msra.mxu0 %v2058
    %2320 = vmatpush.bf16.msra.mxu0 %v2056
    %2321 = vmatpush.bf16.msra.mxu0 %v2054
    %2322 = vmatpush.bf16.msra.mxu0 %v2052
    %2323 = vmatpush.bf16.msra.mxu0 %v2050
    %2324 = vmatmul.bf16.gmra.mxu0 %v1630
    %v2325 = vpop.f32.mrf.mxu0
    %v2326 = vadd.f32 %v2313, %v2325
    %v2327 = vpop.f32.mrf.mxu0
    %2328 = vdwg.mxu0
    %2329 = vmatpush.bf16.msra.mxu0 %v2080
    %2330 = vmatpush.bf16.msra.mxu0 %v2078
    %2331 = vmatpush.bf16.msra.mxu0 %v2076
    %2332 = vmatpush.bf16.msra.mxu0 %v2074
    %2333 = vmatpush.bf16.msra.mxu0 %v2072
    %2334 = vmatpush.bf16.msra.mxu0 %v2070
    %2335 = vmatpush.bf16.msra.mxu0 %v2068
    %2336 = vmatpush.bf16.msra.mxu0 %v2066
    %2337 = vmatmul.bf16.gmra.mxu0 %v1622
    %v2338 = vpop.f32.mrf.mxu0
    %v2339 = vadd.f32 %v2326, %v2338
    %v2340 = vpop.f32.mrf.mxu0
    %2341 = vdwg.mxu0
    %2342 = vmatpush.bf16.msra.mxu0 %v2096
    %2343 = vmatpush.bf16.msra.mxu0 %v2094
    %2344 = vmatpush.bf16.msra.mxu0 %v2092
    %2345 = vmatpush.bf16.msra.mxu0 %v2090
    %2346 = vmatpush.bf16.msra.mxu0 %v2088
    %2347 = vmatpush.bf16.msra.mxu0 %v2086
    %2348 = vmatpush.bf16.msra.mxu0 %v2084
    %2349 = vmatpush.bf16.msra.mxu0 %v2082
    %2350 = vmatmul.bf16.gmra.mxu0 %v1623
    %v2351 = vpop.f32.mrf.mxu0
    %v2352 = vadd.f32 %v2339, %v2351
    %v2353 = vpop.f32.mrf.mxu0
    %2354 = vdwg.mxu0
    %2355 = vmatpush.bf16.msra.mxu0 %v2112
    %2356 = vmatpush.bf16.msra.mxu0 %v2110
    %2357 = vmatpush.bf16.msra.mxu0 %v2108
    %2358 = vmatpush.bf16.msra.mxu0 %v2106
    %2359 = vmatpush.bf16.msra.mxu0 %v2104
    %2360 = vmatpush.bf16.msra.mxu0 %v2102
    %2361 = vmatpush.bf16.msra.mxu0 %v2100
    %2362 = vmatpush.bf16.msra.mxu0 %v2098
    %2363 = vmatmul.bf16.gmra.mxu0 %v1635
    %v2364 = vpop.f32.mrf.mxu0
    %v2365 = vadd.f32 %v2352, %v2364
    %v2366 = vpop.f32.mrf.mxu0
    %2367 = vdwg.mxu0
    %2368 = vmatpush.bf16.msra.mxu0 %v2128
    %2369 = vmatpush.bf16.msra.mxu0 %v2126
    %2370 = vmatpush.bf16.msra.mxu0 %v2124
    %2371 = vmatpush.bf16.msra.mxu0 %v2122
    %2372 = vmatpush.bf16.msra.mxu0 %v2120
    %2373 = vmatpush.bf16.msra.mxu0 %v2118
    %2374 = vmatpush.bf16.msra.mxu0 %v2116
    %2375 = vmatpush.bf16.msra.mxu0 %v2114
    %2376 = vmatmul.bf16.gmra.mxu0 %v1638
    %v2377 = vpop.f32.mrf.mxu0
    %v2378 = vadd.f32 %v2365, %v2377
    %v2379 = vpop.f32.mrf.mxu0
    %2380 = vdwg.mxu0
    %v2381 = vld [vmem:[#allocation2 + $0x480] sm:$0xff]
    %v2382 = vld [vmem:[#allocation2 + $0x488] sm:$0xff]
    %v2383 = vld [vmem:[#allocation2 + $0x490] sm:$0xff]
    %v2384 = vld [vmem:[#allocation2 + $0x498] sm:$0xff]
    %v2385 = vld [vmem:[#allocation2 + $0x4a0] sm:$0xff]
    %v2386 = vld [vmem:[#allocation2 + $0x4a8] sm:$0xff]
    %v2387 = vld [vmem:[#allocation2 + $0x4b0] sm:$0xff]
    %v2388 = vld [vmem:[#allocation2 + $0x4b8] sm:$0xff]
    %v2389 = vld [vmem:[#allocation2 + $0x4c0] sm:$0xff]
    %v2390 = vld [vmem:[#allocation2 + $0x4c8] sm:$0xff]
    %v2391 = vld [vmem:[#allocation2 + $0x4d0] sm:$0xff]
    %v2392 = vld [vmem:[#allocation2 + $0x4d8] sm:$0xff]
    %v2393 = vld [vmem:[#allocation2 + $0x4e0] sm:$0xff]
    %v2394 = vld [vmem:[#allocation2 + $0x4e8] sm:$0xff]
    %v2395 = vld [vmem:[#allocation2 + $0x4f0] sm:$0xff]
    %v2396 = vld [vmem:[#allocation2 + $0x4f8] sm:$0xff]
    %s2397 = scalar_lea.vmem [#allocation7], 32
    %v2398 = vld [vmem:[%s2397] ss:$8 sm:$0x3]
    %v2400 = vperm.slane %v2398, 0
    %v2401 = vperm.slane %v2398, 1
    %v2420 = vunpack.c.l.b16 %v2381
    %v2421 = vunpack.c.h.b16 %v2381
    %v2422 = vunpack.c.l.b16 %v2382
    %v2423 = vunpack.c.h.b16 %v2382
    %v2424 = vunpack.c.l.b16 %v2383
    %v2425 = vunpack.c.h.b16 %v2383
    %v2426 = vunpack.c.l.b16 %v2384
    %v2427 = vunpack.c.h.b16 %v2384
    %v2428 = vunpack.c.l.b16 %v2385
    %v2429 = vunpack.c.h.b16 %v2385
    %v2430 = vunpack.c.l.b16 %v2386
    %v2431 = vunpack.c.h.b16 %v2386
    %v2432 = vunpack.c.l.b16 %v2387
    %v2433 = vunpack.c.h.b16 %v2387
    %v2434 = vunpack.c.l.b16 %v2388
    %v2435 = vunpack.c.h.b16 %v2388
    %v2436 = vunpack.c.l.b16 %v2389
    %v2437 = vunpack.c.h.b16 %v2389
    %v2438 = vunpack.c.l.b16 %v2390
    %v2439 = vunpack.c.h.b16 %v2390
    %v2440 = vunpack.c.l.b16 %v2391
    %v2441 = vunpack.c.h.b16 %v2391
    %v2442 = vunpack.c.l.b16 %v2392
    %v2443 = vunpack.c.h.b16 %v2392
    %v2444 = vunpack.c.l.b16 %v2393
    %v2445 = vunpack.c.h.b16 %v2393
    %v2446 = vunpack.c.l.b16 %v2394
    %v2447 = vunpack.c.h.b16 %v2394
    %v2448 = vunpack.c.l.b16 %v2395
    %v2449 = vunpack.c.h.b16 %v2395
    %v2450 = vunpack.c.l.b16 %v2396
    %v2451 = vunpack.c.h.b16 %v2396
    %v2452 = vpack.c.b16 %v2422, %v2420
    %v2453 = vpack.c.b16 %v2423, %v2421
    %v2454 = vpack.c.b16 %v2426, %v2424
    %v2455 = vpack.c.b16 %v2427, %v2425
    %v2456 = vpack.c.b16 %v2430, %v2428
    %v2457 = vpack.c.b16 %v2431, %v2429
    %v2458 = vpack.c.b16 %v2434, %v2432
    %v2459 = vpack.c.b16 %v2435, %v2433
    %v2460 = vpack.c.b16 %v2438, %v2436
    %v2461 = vpack.c.b16 %v2439, %v2437
    %v2462 = vpack.c.b16 %v2442, %v2440
    %v2463 = vpack.c.b16 %v2443, %v2441
    %v2464 = vpack.c.b16 %v2446, %v2444
    %v2465 = vpack.c.b16 %v2447, %v2445
    %v2466 = vpack.c.b16 %v2450, %v2448
    %v2467 = vpack.c.b16 %v2451, %v2449
    %2484 = vmatpush.bf16.msra.mxu0 %v2466
    %2485 = vmatpush.bf16.msra.mxu0 %v2464
    %2486 = vmatpush.bf16.msra.mxu0 %v2462
    %2487 = vmatpush.bf16.msra.mxu0 %v2460
    %2488 = vmatpush.bf16.msra.mxu0 %v2458
    %2489 = vmatpush.bf16.msra.mxu0 %v2456
    %2490 = vmatpush.bf16.msra.mxu0 %v2454
    %2491 = vmatpush.bf16.msra.mxu0 %v2452
    %2492 = vmatmul.bf16.gmra.mxu0 %v1234
    %v2493 = vpop.f32.mrf.mxu0
    %v2494 = vadd.f32 %v2400, %v2493
    %v2495 = vpop.f32.mrf.mxu0
    %2496 = vdwg.mxu0
    %2497 = vmatpush.bf16.msra.mxu0 %v2467
    %2498 = vmatpush.bf16.msra.mxu0 %v2465
    %2499 = vmatpush.bf16.msra.mxu0 %v2463
    %2500 = vmatpush.bf16.msra.mxu0 %v2461
    %2501 = vmatpush.bf16.msra.mxu0 %v2459
    %2502 = vmatpush.bf16.msra.mxu0 %v2457
    %2503 = vmatpush.bf16.msra.mxu0 %v2455
    %2504 = vmatpush.bf16.msra.mxu0 %v2453
    %2505 = vmatmul.bf16.gmra.mxu0 %v1234
    %v2506 = vpop.f32.mrf.mxu0
    %v2507 = vadd.f32 %v2401, %v2506
    %v2508 = vpop.f32.mrf.mxu0
    %2509 = vdwg.mxu0
    %v2510 = vadd.f32 %v2300, %v2494
    %v2511 = vadd.f32 %v2378, %v2507
    %v2512 = vmax.f32 %v2510, 0.0
    %v2513 = vmax.f32 %v2511, 0.0
    %v2516 = vrot.slane %v2512, 2
    %v2517 = vrot.slane %v2513, 2
    %v2520 = vadd.f32 %v2512, %v2516
    %v2521 = vadd.f32 %v2513, %v2517
    %v2522 = vmul.f32 %v2520, 0.5
    %v2523 = vmul.f32 %v2521, 0.5
    %v2524 = vpack.c.bf16 %v2522, %v2522
    %v2525 = vpack.c.bf16 %v2523, %v2523
    %v2526 = vld [vmem:[#allocation2 + $0x500] sm:$0xff]
    %v2527 = vld [vmem:[#allocation2 + $0x508] sm:$0xff]
    %v2528 = vld [vmem:[#allocation2 + $0x510] sm:$0xff]
    %v2529 = vld [vmem:[#allocation2 + $0x518] sm:$0xff]
    %v2530 = vld [vmem:[#allocation2 + $0x520] sm:$0xff]
    %v2531 = vld [vmem:[#allocation2 + $0x528] sm:$0xff]
    %v2532 = vld [vmem:[#allocation2 + $0x530] sm:$0xff]
    %v2533 = vld [vmem:[#allocation2 + $0x538] sm:$0xff]
    %v2534 = vld [vmem:[#allocation2 + $0x540] sm:$0xff]
    %v2535 = vld [vmem:[#allocation2 + $0x548] sm:$0xff]
    %v2536 = vld [vmem:[#allocation2 + $0x550] sm:$0xff]
    %v2537 = vld [vmem:[#allocation2 + $0x558] sm:$0xff]
    %v2538 = vld [vmem:[#allocation2 + $0x560] sm:$0xff]
    %v2539 = vld [vmem:[#allocation2 + $0x568] sm:$0xff]
    %v2540 = vld [vmem:[#allocation2 + $0x570] sm:$0xff]
    %v2541 = vld [vmem:[#allocation2 + $0x578] sm:$0xff]
    %v2542 = vld [vmem:[#allocation2 + $0x580] sm:$0xff]
    %v2543 = vld [vmem:[#allocation2 + $0x588] sm:$0xff]
    %v2544 = vld [vmem:[#allocation2 + $0x590] sm:$0xff]
    %v2545 = vld [vmem:[#allocation2 + $0x598] sm:$0xff]
    %v2546 = vld [vmem:[#allocation2 + $0x5a0] sm:$0xff]
    %v2547 = vld [vmem:[#allocation2 + $0x5a8] sm:$0xff]
    %v2548 = vld [vmem:[#allocation2 + $0x5b0] sm:$0xff]
    %v2549 = vld [vmem:[#allocation2 + $0x5b8] sm:$0xff]
    %v2550 = vld [vmem:[#allocation2 + $0x5c0] sm:$0xff]
    %v2551 = vld [vmem:[#allocation2 + $0x5c8] sm:$0xff]
    %v2552 = vld [vmem:[#allocation2 + $0x5d0] sm:$0xff]
    %v2553 = vld [vmem:[#allocation2 + $0x5d8] sm:$0xff]
    %v2554 = vld [vmem:[#allocation2 + $0x5e0] sm:$0xff]
    %v2555 = vld [vmem:[#allocation2 + $0x5e8] sm:$0xff]
    %v2556 = vld [vmem:[#allocation2 + $0x5f0] sm:$0xff]
    %v2557 = vld [vmem:[#allocation2 + $0x5f8] sm:$0xff]
    %s2558 = scalar_lea.vmem [#allocation7], 33
    %v2559 = vld [vmem:[%s2558] ss:$8 sm:$0x3]
    %v2561 = vperm.slane %v2559, 0
    %v2562 = vperm.slane %v2559, 1
    %v2597 = vunpack.c.l.b16 %v2526
    %v2598 = vunpack.c.h.b16 %v2526
    %v2599 = vunpack.c.l.b16 %v2527
    %v2600 = vunpack.c.h.b16 %v2527
    %v2601 = vunpack.c.l.b16 %v2528
    %v2602 = vunpack.c.h.b16 %v2528
    %v2603 = vunpack.c.l.b16 %v2529
    %v2604 = vunpack.c.h.b16 %v2529
    %v2605 = vunpack.c.l.b16 %v2530
    %v2606 = vunpack.c.h.b16 %v2530
    %v2607 = vunpack.c.l.b16 %v2531
    %v2608 = vunpack.c.h.b16 %v2531
    %v2609 = vunpack.c.l.b16 %v2532
    %v2610 = vunpack.c.h.b16 %v2532
    %v2611 = vunpack.c.l.b16 %v2533
    %v2612 = vunpack.c.h.b16 %v2533
    %v2613 = vunpack.c.l.b16 %v2534
    %v2614 = vunpack.c.h.b16 %v2534
    %v2615 = vunpack.c.l.b16 %v2535
    %v2616 = vunpack.c.h.b16 %v2535
    %v2617 = vunpack.c.l.b16 %v2536
    %v2618 = vunpack.c.h.b16 %v2536
    %v2619 = vunpack.c.l.b16 %v2537
    %v2620 = vunpack.c.h.b16 %v2537
    %v2621 = vunpack.c.l.b16 %v2538
    %v2622 = vunpack.c.h.b16 %v2538
    %v2623 = vunpack.c.l.b16 %v2539
    %v2624 = vunpack.c.h.b16 %v2539
    %v2625 = vunpack.c.l.b16 %v2540
    %v2626 = vunpack.c.h.b16 %v2540
    %v2627 = vunpack.c.l.b16 %v2541
    %v2628 = vunpack.c.h.b16 %v2541
    %v2629 = vunpack.c.l.b16 %v2542
    %v2630 = vunpack.c.h.b16 %v2542
    %v2631 = vunpack.c.l.b16 %v2543
    %v2632 = vunpack.c.h.b16 %v2543
    %v2633 = vunpack.c.l.b16 %v2544
    %v2634 = vunpack.c.h.b16 %v2544
    %v2635 = vunpack.c.l.b16 %v2545
    %v2636 = vunpack.c.h.b16 %v2545
    %v2637 = vunpack.c.l.b16 %v2546
    %v2638 = vunpack.c.h.b16 %v2546
    %v2639 = vunpack.c.l.b16 %v2547
    %v2640 = vunpack.c.h.b16 %v2547
    %v2641 = vunpack.c.l.b16 %v2548
    %v2642 = vunpack.c.h.b16 %v2548
    %v2643 = vunpack.c.l.b16 %v2549
    %v2644 = vunpack.c.h.b16 %v2549
    %v2645 = vunpack.c.l.b16 %v2550
    %v2646 = vunpack.c.h.b16 %v2550
    %v2647 = vunpack.c.l.b16 %v2551
    %v2648 = vunpack.c.h.b16 %v2551
    %v2649 = vunpack.c.l.b16 %v2552
    %v2650 = vunpack.c.h.b16 %v2552
    %v2651 = vunpack.c.l.b16 %v2553
    %v2652 = vunpack.c.h.b16 %v2553
    %v2653 = vunpack.c.l.b16 %v2554
    %v2654 = vunpack.c.h.b16 %v2554
    %v2655 = vunpack.c.l.b16 %v2555
    %v2656 = vunpack.c.h.b16 %v2555
    %v2657 = vunpack.c.l.b16 %v2556
    %v2658 = vunpack.c.h.b16 %v2556
    %v2659 = vunpack.c.l.b16 %v2557
    %v2660 = vunpack.c.h.b16 %v2557
    %v2661 = vpack.c.b16 %v2599, %v2597
    %v2662 = vpack.c.b16 %v2600, %v2598
    %v2663 = vpack.c.b16 %v2603, %v2601
    %v2664 = vpack.c.b16 %v2604, %v2602
    %v2665 = vpack.c.b16 %v2607, %v2605
    %v2666 = vpack.c.b16 %v2608, %v2606
    %v2667 = vpack.c.b16 %v2611, %v2609
    %v2668 = vpack.c.b16 %v2612, %v2610
    %v2669 = vpack.c.b16 %v2615, %v2613
    %v2670 = vpack.c.b16 %v2616, %v2614
    %v2671 = vpack.c.b16 %v2619, %v2617
    %v2672 = vpack.c.b16 %v2620, %v2618
    %v2673 = vpack.c.b16 %v2623, %v2621
    %v2674 = vpack.c.b16 %v2624, %v2622
    %v2675 = vpack.c.b16 %v2627, %v2625
    %v2676 = vpack.c.b16 %v2628, %v2626
    %v2677 = vpack.c.b16 %v2631, %v2629
    %v2678 = vpack.c.b16 %v2632, %v2630
    %v2679 = vpack.c.b16 %v2635, %v2633
    %v2680 = vpack.c.b16 %v2636, %v2634
    %v2681 = vpack.c.b16 %v2639, %v2637
    %v2682 = vpack.c.b16 %v2640, %v2638
    %v2683 = vpack.c.b16 %v2643, %v2641
    %v2684 = vpack.c.b16 %v2644, %v2642
    %v2685 = vpack.c.b16 %v2647, %v2645
    %v2686 = vpack.c.b16 %v2648, %v2646
    %v2687 = vpack.c.b16 %v2651, %v2649
    %v2688 = vpack.c.b16 %v2652, %v2650
    %v2689 = vpack.c.b16 %v2655, %v2653
    %v2690 = vpack.c.b16 %v2656, %v2654
    %v2691 = vpack.c.b16 %v2659, %v2657
    %v2692 = vpack.c.b16 %v2660, %v2658
    %2725 = vmatpush.bf16.msra.mxu0 %v2675
    %2726 = vmatpush.bf16.msra.mxu0 %v2673
    %2727 = vmatpush.bf16.msra.mxu0 %v2671
    %2728 = vmatpush.bf16.msra.mxu0 %v2669
    %2729 = vmatpush.bf16.msra.mxu0 %v2667
    %2730 = vmatpush.bf16.msra.mxu0 %v2665
    %2731 = vmatpush.bf16.msra.mxu0 %v2663
    %2732 = vmatpush.bf16.msra.mxu0 %v2661
    %2733 = vmatmul.bf16.gmra.mxu0 %v2524
    %v2734 = vpop.f32.mrf.mxu0
    %v2735 = vadd.f32 %v2561, %v2734
    %v2736 = vpop.f32.mrf.mxu0
    %2737 = vdwg.mxu0
    %2738 = vmatpush.bf16.msra.mxu0 %v2691
    %2739 = vmatpush.bf16.msra.mxu0 %v2689
    %2740 = vmatpush.bf16.msra.mxu0 %v2687
    %2741 = vmatpush.bf16.msra.mxu0 %v2685
    %2742 = vmatpush.bf16.msra.mxu0 %v2683
    %2743 = vmatpush.bf16.msra.mxu0 %v2681
    %2744 = vmatpush.bf16.msra.mxu0 %v2679
    %2745 = vmatpush.bf16.msra.mxu0 %v2677
    %2746 = vmatmul.bf16.gmra.mxu0 %v2525
    %v2747 = vpop.f32.mrf.mxu0
    %v2748 = vadd.f32 %v2735, %v2747
    %v2749 = vpop.f32.mrf.mxu0
    %2750 = vdwg.mxu0
    %2751 = vmatpush.bf16.msra.mxu0 %v2676
    %2752 = vmatpush.bf16.msra.mxu0 %v2674
    %2753 = vmatpush.bf16.msra.mxu0 %v2672
    %2754 = vmatpush.bf16.msra.mxu0 %v2670
    %2755 = vmatpush.bf16.msra.mxu0 %v2668
    %2756 = vmatpush.bf16.msra.mxu0 %v2666
    %2757 = vmatpush.bf16.msra.mxu0 %v2664
    %2758 = vmatpush.bf16.msra.mxu0 %v2662
    %2759 = vmatmul.bf16.gmra.mxu0 %v2524
    %v2760 = vpop.f32.mrf.mxu0
    %v2761 = vadd.f32 %v2562, %v2760
    %v2762 = vpop.f32.mrf.mxu0
    %2763 = vdwg.mxu0
    %2764 = vmatpush.bf16.msra.mxu0 %v2692
    %2765 = vmatpush.bf16.msra.mxu0 %v2690
    %2766 = vmatpush.bf16.msra.mxu0 %v2688
    %2767 = vmatpush.bf16.msra.mxu0 %v2686
    %2768 = vmatpush.bf16.msra.mxu0 %v2684
    %2769 = vmatpush.bf16.msra.mxu0 %v2682
    %2770 = vmatpush.bf16.msra.mxu0 %v2680
    %2771 = vmatpush.bf16.msra.mxu0 %v2678
    %2772 = vmatmul.bf16.gmra.mxu0 %v2525
    %v2773 = vpop.f32.mrf.mxu0
    %v2774 = vadd.f32 %v2761, %v2773
    %v2775 = vpop.f32.mrf.mxu0
    %2776 = vdwg.mxu0
    %v2777 = vmax.f32 %v2748, 0.0
    %v2778 = vmax.f32 %v2774, 0.0
    %v2779 = vpack.c.bf16 %v2777, %v2777
    %v2780 = vpack.c.bf16 %v2778, %v2778
    %v2781 = vld [vmem:[%s5] sm:$0xf]
    %v2782 = vld [vmem:[%s5 + $0x4] sm:$0xf]
    %v2783 = vld [vmem:[%s5 + $0x8] sm:$0xf]
    %v2784 = vld [vmem:[%s5 + $0xc] sm:$0xf]
    %v2785 = vld [vmem:[%s5 + $0x10] sm:$0xf]
    %v2786 = vld [vmem:[%s5 + $0x14] sm:$0xf]
    %v2787 = vld [vmem:[%s5 + $0x18] sm:$0xf]
    %v2788 = vld [vmem:[%s5 + $0x1c] sm:$0xf]
    %v2789 = vld [vmem:[%s5 + $0x20] sm:$0xf]
    %v2790 = vld [vmem:[%s5 + $0x24] sm:$0xf]
    %v2791 = vld [vmem:[%s5 + $0x28] sm:$0xf]
    %v2792 = vld [vmem:[%s5 + $0x2c] sm:$0xf]
    %v2793 = vld [vmem:[%s5 + $0x30] sm:$0xf]
    %v2794 = vld [vmem:[%s5 + $0x34] sm:$0xf]
    %v2795 = vld [vmem:[%s5 + $0x38] sm:$0xf]
    %v2796 = vld [vmem:[%s5 + $0x3c] sm:$0xf]
    %v2797 = vld [vmem:[%s5 + $0x40] sm:$0xf]
    %v2798 = vld [vmem:[%s5 + $0x44] sm:$0xf]
    %v2799 = vld [vmem:[%s5 + $0x48] sm:$0xf]
    %v2800 = vld [vmem:[%s5 + $0x4c] sm:$0xf]
    %v2801 = vld [vmem:[%s5 + $0x50] sm:$0xf]
    %v2802 = vld [vmem:[%s5 + $0x54] sm:$0xf]
    %v2803 = vld [vmem:[%s5 + $0x58] sm:$0xf]
    %v2804 = vld [vmem:[%s5 + $0x5c] sm:$0xf]
    %v2805 = vld [vmem:[%s5 + $0x60] sm:$0xf]
    %v2806 = vld [vmem:[%s5 + $0x64] sm:$0xf]
    %v2807 = vld [vmem:[%s5 + $0x68] sm:$0xf]
    %v2808 = vld [vmem:[%s5 + $0x6c] sm:$0xf]
    %v2809 = vld [vmem:[%s5 + $0x70] sm:$0xf]
    %v2810 = vld [vmem:[%s5 + $0x74] sm:$0xf]
    %v2811 = vld [vmem:[%s5 + $0x78] sm:$0xf]
    %v2812 = vld [vmem:[%s5 + $0x7c] sm:$0xf]
    %v2813 = vld [vmem:[#allocation7 + $0x22] ss:$0 sm:$0xff]
    %v2846 = vunpack.c.l.b16 %v2781
    %v2847 = vunpack.c.l.b16 %v2782
    %v2848 = vunpack.c.l.b16 %v2783
    %v2849 = vunpack.c.l.b16 %v2784
    %v2850 = vunpack.c.l.b16 %v2785
    %v2851 = vunpack.c.l.b16 %v2786
    %v2852 = vunpack.c.l.b16 %v2787
    %v2853 = vunpack.c.l.b16 %v2788
    %v2854 = vunpack.c.l.b16 %v2789
    %v2855 = vunpack.c.l.b16 %v2790
    %v2856 = vunpack.c.l.b16 %v2791
    %v2857 = vunpack.c.l.b16 %v2792
    %v2858 = vunpack.c.l.b16 %v2793
    %v2859 = vunpack.c.l.b16 %v2794
    %v2860 = vunpack.c.l.b16 %v2795
    %v2861 = vunpack.c.l.b16 %v2796
    %v2862 = vunpack.c.l.b16 %v2797
    %v2863 = vunpack.c.l.b16 %v2798
    %v2864 = vunpack.c.l.b16 %v2799
    %v2865 = vunpack.c.l.b16 %v2800
    %v2866 = vunpack.c.l.b16 %v2801
    %v2867 = vunpack.c.l.b16 %v2802
    %v2868 = vunpack.c.l.b16 %v2803
    %v2869 = vunpack.c.l.b16 %v2804
    %v2870 = vunpack.c.l.b16 %v2805
    %v2871 = vunpack.c.l.b16 %v2806
    %v2872 = vunpack.c.l.b16 %v2807
    %v2873 = vunpack.c.l.b16 %v2808
    %v2874 = vunpack.c.l.b16 %v2809
    %v2875 = vunpack.c.l.b16 %v2810
    %v2876 = vunpack.c.l.b16 %v2811
    %v2877 = vunpack.c.l.b16 %v2812
    %v2878 = vpack.c.b16 %v2847, %v2846
    %v2879 = vpack.c.b16 %v2849, %v2848
    %v2880 = vpack.c.b16 %v2851, %v2850
    %v2881 = vpack.c.b16 %v2853, %v2852
    %v2882 = vpack.c.b16 %v2855, %v2854
    %v2883 = vpack.c.b16 %v2857, %v2856
    %v2884 = vpack.c.b16 %v2859, %v2858
    %v2885 = vpack.c.b16 %v2861, %v2860
    %v2886 = vpack.c.b16 %v2863, %v2862
    %v2887 = vpack.c.b16 %v2865, %v2864
    %v2888 = vpack.c.b16 %v2867, %v2866
    %v2889 = vpack.c.b16 %v2869, %v2868
    %v2890 = vpack.c.b16 %v2871, %v2870
    %v2891 = vpack.c.b16 %v2873, %v2872
    %v2892 = vpack.c.b16 %v2875, %v2874
    %v2893 = vpack.c.b16 %v2877, %v2876
    %2910 = vmatpush.bf16.msra.mxu0 %v2885
    %2911 = vmatpush.bf16.msra.mxu0 %v2884
    %2912 = vmatpush.bf16.msra.mxu0 %v2883
    %2913 = vmatpush.bf16.msra.mxu0 %v2882
    %2914 = vmatpush.bf16.msra.mxu0 %v2881
    %2915 = vmatpush.bf16.msra.mxu0 %v2880
    %2916 = vmatpush.bf16.msra.mxu0 %v2879
    %2917 = vmatpush.bf16.msra.mxu0 %v2878
    %2918 = vmatmul.bf16.gmra.mxu0 %v2779
    %v2919 = vpop.f32.mrf.mxu0
    %v2920 = vadd.f32 %v2813, %v2919
    %v2921 = vpop.f32.mrf.mxu0
    %2922 = vdwg.mxu0
    %2923 = vmatpush.bf16.msra.mxu0 %v2893
    %2924 = vmatpush.bf16.msra.mxu0 %v2892
    %2925 = vmatpush.bf16.msra.mxu0 %v2891
    %2926 = vmatpush.bf16.msra.mxu0 %v2890
    %2927 = vmatpush.bf16.msra.mxu0 %v2889
    %2928 = vmatpush.bf16.msra.mxu0 %v2888
    %2929 = vmatpush.bf16.msra.mxu0 %v2887
    %2930 = vmatpush.bf16.msra.mxu0 %v2886
    %2931 = vmatmul.bf16.gmra.mxu0 %v2780
    %v2932 = vpop.f32.mrf.mxu0
    %v2933 = vadd.f32 %v2920, %v2932
    %v2934 = vpop.f32.mrf.mxu0
    %2935 = vdwg.mxu0
    %vm2936 = vcmask 33792
    %2937 = vst.msk [vmem:[#allocation9] sm:$0x3] %vm2936, %v2933
    // Predicated region
    $region38: #{fwd.1} parent=1 // pred_check
      _
    $region39: #{fwd.1} parent=1 // pred_check_branch
      %2939 = sbr.rel (0) target = $region41
    $region40: #{fwd.1} parent=1 // pred_region
      %2941 = vsyncadd [#allocation6], 0
      %s2943 = sshll.u32 [#allocation9], 4
      %s2944 = int_to_ptr.vmem [resolvable:$true] %s2943
      %s2945 = sshll.u32 %s7, 4
      %s2946 = int_to_ptr.hbm [resolvable:$true] %s2945
      %2948 = dma.vmem_to_hbm [thread:$0]  %s2944, 32, %s2946, [#allocation6]
    $region41: #{fwd.1} parent=1 // pred_fallthru
      _
    // Predicated region
    $region42: #{fwd.1} parent=1 // pred_check
      _
    $region43: #{fwd.1} parent=1 // pred_check_branch
      %2950 = sbr.rel (0) target = $region45
    $region44: #{fwd.1} parent=1 // pred_region
      %2952 = dma.done [#allocation6], 32
    $region45: #{fwd.1} parent=1 // pred_fallthru
      _
    %2953 = vsyncpa [#allocation5], 1
    %2954 = vsyncpa [#allocation8], 1
    %2955 = vsyncpa [#allocation6], 1
  %2956 = vsyncmov [#allocation3]
  %s2957 = vpop.sfrf %2956
  %p2958 = scmp.eq.s32.totalorder %s2957, 0
  %p2959 = pneg %p2958
  %2961 = shalt.err (%p2959)

</llo_original>
